<compile_context>
chip_gen: v6e
topology: v6e:2x2x1
jax: 0.10.0
libtpu: 0.0.40
codegen_flags: <defaults>
</compile_context>

<pallas_src>
import functools

import jax
import jax.numpy as jnp
from jax import lax
from jax.experimental import pallas as pl
from jax.experimental.pallas import tpu as pltpu

EPS_LN = 1e-12    # TF-style LayerNorm eps (inside the sqrt), as in the reference
EPS_NORM = 1e-12  # guard for L2 normalizations (zero vectors)


def _layer_norm(h, w, b):
    u = jnp.mean(h, axis=-1, keepdims=True)
    s = jnp.mean((h - u) ** 2, axis=-1, keepdims=True)
    return w * ((h - u) * lax.rsqrt(s + EPS_LN)) + b


def oti_kernel(x_ref, wv_ref, bv_ref, pos_ref,
               ln1w_ref, ln1b_ref, wqkv_ref, bqkv_ref, wo_ref, bo_ref,
               ln2w_ref, ln2b_ref, wfc_ref, bfc_ref, wproj_ref, bproj_ref,
               txt_ref, scale_ref,
               emb_ref, log_ref,
               acc_ref,
               *, bt, t, d, heads, ntxt):
    k_step = pl.program_id(1)

    # ---- visual encoder: accumulate (Bt*T, tk) @ (tk, D) over the pixel axis --
    @pl.when(k_step == 0)
    def _():
        acc_ref[...] = jnp.zeros_like(acc_ref)

    x_tile = x_ref[...].reshape(bt * t, -1).astype(jnp.bfloat16)  # cast in-kernel
    acc_ref[...] += jnp.dot(x_tile, wv_ref[...],
                            preferred_element_type=jnp.float32)

    # ---- last K step: temporal transformer fusion + retrieval head ------------
    @pl.when(k_step == pl.num_programs(1) - 1)
    def _():
        emb = acc_ref[...] + bv_ref[...]                  # (Bt*T, D) per-frame embs
        embv = emb.reshape(bt, t, d)

        # video_emb_front = temporal mean of the raw per-frame embeddings
        front = jnp.mean(embv, axis=1)                    # (Bt, D)

        # frame position embeddings + 1-layer temporal transformer
        x = embv + pos_ref[...]                           # (Bt, T, D)

        # --- attention branch ---
        h1 = _layer_norm(x, ln1w_ref[...], ln1b_ref[...])
        qkv = (jnp.dot(h1.reshape(bt * t, d).astype(jnp.bfloat16), wqkv_ref[...],
                       preferred_element_type=jnp.float32)
               + bqkv_ref[...]).reshape(bt, t, 3 * d)
        q = qkv[..., 0 * d:1 * d]
        k = qkv[..., 1 * d:2 * d]
        v = qkv[..., 2 * d:3 * d]

        dh = d // heads
        att_scale = 1.0 / (dh ** 0.5)
        qb = q.astype(jnp.bfloat16)
        kb = k.astype(jnp.bfloat16)
        vb = v.astype(jnp.bfloat16)
        lane = lax.broadcasted_iota(jnp.int32, (1, 1, d), 2)

        # TODO(synk): with D=128 / heads=2 the full-width column-masked form is
        # kept (per review); for D > 128 switch to (heads, T, dh) head slices.
        ctx = jnp.zeros((bt, t, d), jnp.float32)
        for hh in range(heads):
            m = jnp.logical_and(lane >= hh * dh, lane < (hh + 1) * dh)
            qm = jnp.where(m, qb, jnp.zeros_like(qb))
            s_ = jnp.einsum('bqd,bkd->bqk', qm, kb,
                            preferred_element_type=jnp.float32) * att_scale
            s_ = s_ - jnp.max(s_, axis=-1, keepdims=True)
            p_ = jnp.exp(s_)
            p_ = p_ / jnp.sum(p_, axis=-1, keepdims=True)
            vm = jnp.where(m, vb, jnp.zeros_like(vb))
            ctx = ctx + jnp.einsum('bqk,bkd->bqd', p_.astype(jnp.bfloat16), vm,
                                   preferred_element_type=jnp.float32)

        attn_out = (jnp.dot(ctx.reshape(bt * t, d).astype(jnp.bfloat16), wo_ref[...],
                            preferred_element_type=jnp.float32)
                    + bo_ref[...])
        x = x + attn_out.reshape(bt, t, d)

        # --- MLP branch (QuickGELU, exact sigmoid) ---
        h2 = _layer_norm(x, ln2w_ref[...], ln2b_ref[...])
        hid = (jnp.dot(h2.reshape(bt * t, d).astype(jnp.bfloat16), wfc_ref[...],
                       preferred_element_type=jnp.float32)
               + bfc_ref[...])
        hid = hid / (1.0 + jnp.exp(-1.702 * hid))         # x * sigmoid(1.702 x)
        mlp_out = (jnp.dot(hid.astype(jnp.bfloat16), wproj_ref[...],
                           preferred_element_type=jnp.float32)
                   + bproj_ref[...])
        x = x + mlp_out.reshape(bt, t, d)

        # temporal mean -> fused video embedding
        vid = jnp.mean(x, axis=1)                         # (Bt, D)

        # --- retrieval head ---
        vn = vid * lax.rsqrt(jnp.sum(vid * vid, axis=-1, keepdims=True) + EPS_NORM)
        fn = front * lax.rsqrt(jnp.sum(front * front, axis=-1, keepdims=True)
                               + EPS_NORM)

        # get_orthogonal_num_vec(now=vn, best=fn): elementwise (matches reference:
        # maps = now * best / ||best||^2 * best; res = best + (now - maps))
        l2sums = jnp.sum(fn * fn, axis=-1, keepdims=True)
        maps = (vn * fn / l2sums) * fn
        res = fn + (vn - maps)

        logit_scale = scale_ref[0]                        # exp() done host-side
        both = jnp.concatenate([res, vn], axis=0).astype(jnp.bfloat16)  # (2Bt, D)
        logits = logit_scale * lax.dot_general(
            both, txt_ref[...], (((1,), (1,)), ((), ())),
            preferred_element_type=jnp.float32)           # (2Bt, NTXT)

        emb_ref[:, 0:1, :] = vn.reshape(bt, 1, d)
        emb_ref[:, 1:2, :] = fn.reshape(bt, 1, d)
        log_ref[:, 0:1, :] = logits[:bt].reshape(bt, 1, ntxt)
        log_ref[:, 1:2, :] = logits[bt:].reshape(bt, 1, ntxt)


# ----------------------------------------------------------------------------
# Wrapper
# ----------------------------------------------------------------------------
def _pick_bt(b, t, max_rows=256, min_rows=128):
    """Videos per grid step: Bt*T ~ 128-256 MXU rows; prefer >=2 batch blocks
    (v7x has 2 TensorCores) only if that keeps >= min_rows rows."""
    divs = [x for x in range(1, b + 1) if b % x == 0]
    fit = [x for x in divs if x * t <= max_rows] or [1]
    bt = fit[-1]
    for x in reversed(fit):
        if b // x >= 2 and x * t >= min_rows:
            bt = x
            break
    return bt


def _pick_tk(chw, d, rows, budget_bytes=8 * 1024 * 1024):
    """Largest 128-multiple divisor of chw whose double-buffered weight+image
    tiles fit a small VMEM budget (demo chw=768 -> tk=768, nk=1)."""
    cands = [m for m in range(128, chw + 1, 128) if chw % m == 0] or [chw]
    def cost(m):
        return m * d * 2 * 2 + rows * m * 4 * 2   # bf16 w tile + f32 image tile, x2 bufs
    fitting = [m for m in cands if cost(m) <= budget_bytes]
    return fitting[-1] if fitting else cands[0]


def prepare_params(params):
    """One-time prep OUTSIDE the jitted forward: bf16 MXU weights (no per-call
    HBM cast round-trips) + precomputed exp(logit_scale)."""
    p = dict(params)
    for key in ('w_vis', 'w_qkv', 'w_out', 'w_fc', 'w_proj'):
        p[key] = params[key].astype(jnp.bfloat16)
    p['logit_scale_exp'] = jnp.exp(params['logit_scale']).reshape(1).astype(jnp.float32)
    return p


def oti_forward(images, text_emb, params):
    b, t, c, h, w = images.shape
    chw = c * h * w
    d = params['w_vis'].shape[1]
    heads = max(1, d // 64)
    ntxt = text_emb.shape[0]

    bt = _pick_bt(b, t)
    tk = _pick_tk(chw, d, bt * t)
    nk = chw // tk

    x = images.reshape(b, t, chw)                    # stays f32; cast in-kernel

    pos = params['pos_table'][:t]
    scale = params.get('logit_scale_exp')
    if scale is None:
        scale = jnp.exp(params['logit_scale']).reshape(1).astype(jnp.float32)

    # text L2-norm is batch-invariant -> hoist out of kernel, stream as bf16
    txt = text_emb.astype(jnp.float32)
    txt_n = (txt * lax.rsqrt(jnp.sum(txt * txt, axis=-1, keepdims=True) + EPS_NORM)
             ).astype(jnp.bfloat16)

    def _const_spec(arr):
        nd = arr.ndim
        idx = lambda i, kk, nd=nd: (0,) * nd
        try:
            # Grid-invariant input: fetched once; single-buffer to halve its VMEM.
            return pl.BlockSpec(arr.shape, idx, pipeline_mode=pl.Buffered(1))
        except (TypeError, ValueError, AttributeError):
            return pl.BlockSpec(arr.shape, idx)

    in_specs = [
        pl.BlockSpec((bt, t, tk), lambda i, kk: (i, 0, kk)),   # images (f32)
        pl.BlockSpec((tk, d), lambda i, kk: (kk, 0)),          # w_vis (bf16, streamed)
        _const_spec(params['b_vis']),
        _const_spec(pos),
        _const_spec(params['ln1_w']), _const_spec(params['ln1_b']),
        _const_spec(params['w_qkv']), _const_spec(params['b_qkv']),
        _const_spec(params['w_out']), _const_spec(params['b_out']),
        _const_spec(params['ln2_w']), _const_spec(params['ln2_b']),
        _const_spec(params['w_fc']), _const_spec(params['b_fc']),
        _const_spec(params['w_proj']), _const_spec(params['b_proj']),
        _const_spec(txt_n),
        pl.BlockSpec(memory_space=pltpu.MemorySpace.SMEM),     # logit scale
    ]
    out_specs = (
        pl.BlockSpec((bt, 2, d), lambda i, kk: (i, 0, 0)),
        pl.BlockSpec((bt, 2, ntxt), lambda i, kk: (i, 0, 0)),
    )
    out_shape = (
        jax.ShapeDtypeStruct((b, 2, d), jnp.float32),
        jax.ShapeDtypeStruct((b, 2, ntxt), jnp.float32),
    )

    kernel = functools.partial(oti_kernel, bt=bt, t=t, d=d, heads=heads, ntxt=ntxt)

    embs, logits = pl.pallas_call(
        kernel,
        out_shape=out_shape,
        grid=(b // bt, nk),
        in_specs=in_specs,
        out_specs=out_specs,
        scratch_shapes=[pltpu.VMEM((bt * t, d), jnp.float32)],
        compiler_params=pltpu.CompilerParams(
            dimension_semantics=("parallel", "arbitrary"),
            # Generation-safe ceiling: below v7x's 64 MiB physical VMEM, ample
            # headroom for these tiles on v5e/v6e (128 MiB).
            vmem_limit_bytes=48 * 1024 * 1024),
    )(x, params['w_vis'], params['b_vis'], pos,
      params['ln1_w'], params['ln1_b'], params['w_qkv'], params['b_qkv'],
      params['w_out'], params['b_out'], params['ln2_w'], params['ln2_b'],
      params['w_fc'], params['b_fc'], params['w_proj'], params['b_proj'],
      txt_n, scale)

    # (video_emb, video_emb_front, logits_new, logits_after)
    return (embs[:, 0, :], embs[:, 1, :], logits[:, 0, :], logits[:, 1, :])


# ----------------------------------------------------------------------------
# Parameters (deterministic, synthetic)
# ----------------------------------------------------------------------------
def init_params(key, c, h, w, d, max_t):
    pix = c * h * w
    ks = jax.random.split(key, 6)
    std = 0.02
    return {
        # synthetic visual encoder (stand-in for clip_model.visual)
        'w_vis': std * jax.random.normal(ks[0], (pix, d), jnp.float32),
        'b_vis': jnp.zeros((1, d), jnp.float32),
        # video_header / TemporalTransformer (1 layer)
        'pos_table': std * jax.random.normal(ks[1], (max_t, d), jnp.float32),
        'ln1_w': jnp.ones((1, d), jnp.float32),
        'ln1_b': jnp.zeros((1, d), jnp.float32),
        'w_qkv': std * jax.random.normal(ks[2], (d, 3 * d), jnp.float32),
        'b_qkv': jnp.zeros((1, 3 * d), jnp.float32),
        'w_out': std * jax.random.normal(ks[3], (d, d), jnp.float32),
        'b_out': jnp.zeros((1, d), jnp.float32),
        'ln2_w': jnp.ones((1, d), jnp.float32),
        'ln2_b': jnp.zeros((1, d), jnp.float32),
        'w_fc': std * jax.random.normal(ks[4], (d, 4 * d), jnp.float32),
        'b_fc': jnp.zeros((1, 4 * d), jnp.float32),
        'w_proj': std * jax.random.normal(ks[5], (4 * d, d), jnp.float32),
        'b_proj': jnp.zeros((1, d), jnp.float32),
        # OTI scalars
        'logit_scale': jnp.asarray(jnp.log(1.0 / 0.07), jnp.float32),
        'ratio': jnp.asarray(0.5, jnp.float32),  # present in __init__, unused
    }


if __name__ == "__main__":
    B, T, C, H, W = 2, 8, 3, 16, 16
    D = 128          # embed dim -> heads = D // 64 = 2
    NTXT = 8

    key = jax.random.PRNGKey(0)
    k_img, k_txt, k_par = jax.random.split(key, 3)
    images = jax.random.normal(k_img, (B, T, C, H, W), jnp.float32)
    text_emb = jax.random.normal(k_txt, (NTXT, D), jnp.float32)
    params = prepare_params(init_params(k_par, C, H, W, D, max_t=16))

    fwd = jax.jit(oti_forward)
    outs = jax.block_until_ready(fwd(images, text_emb, params))
    video_emb, video_emb_front, logits_new, logits_after = outs

    assert video_emb.shape == (B, D)
    assert video_emb_front.shape == (B, D)
    assert logits_new.shape == (B, NTXT)
    assert logits_after.shape == (B, NTXT)
    assert all(bool(jnp.all(jnp.isfinite(o))) for o in outs)
    print("KERNEL_OK")
</pallas_src>

<mosaic_0001>
module attributes {stable_mosaic.version = 11 : i64} {
  func.func @oti_kernel(%arg0: i32, %arg1: i32, %arg2: memref<2x8x768xf32, #tpu.memory_space<vmem>>, %arg3: memref<768x128xbf16, #tpu.memory_space<vmem>>, %arg4: memref<1x128xf32, #tpu.memory_space<vmem>>, %arg5: memref<8x128xf32, #tpu.memory_space<vmem>>, %arg6: memref<1x128xf32, #tpu.memory_space<vmem>>, %arg7: memref<1x128xf32, #tpu.memory_space<vmem>>, %arg8: memref<128x384xbf16, #tpu.memory_space<vmem>>, %arg9: memref<1x384xf32, #tpu.memory_space<vmem>>, %arg10: memref<128x128xbf16, #tpu.memory_space<vmem>>, %arg11: memref<1x128xf32, #tpu.memory_space<vmem>>, %arg12: memref<1x128xf32, #tpu.memory_space<vmem>>, %arg13: memref<1x128xf32, #tpu.memory_space<vmem>>, %arg14: memref<128x512xbf16, #tpu.memory_space<vmem>>, %arg15: memref<1x512xf32, #tpu.memory_space<vmem>>, %arg16: memref<512x128xbf16, #tpu.memory_space<vmem>>, %arg17: memref<1x128xf32, #tpu.memory_space<vmem>>, %arg18: memref<8x128xbf16, #tpu.memory_space<vmem>>, %arg19: memref<1xf32, #tpu.memory_space<smem>>, %arg20: memref<2x2x128xf32, #tpu.memory_space<vmem>>, %arg21: memref<2x2x8xf32, #tpu.memory_space<vmem>>, %arg22: memref<16x128xf32, #tpu.memory_space<vmem>>) attributes {dimension_semantics = [#tpu.dimension_semantics<parallel>, #tpu.dimension_semantics<arbitrary>], iteration_bounds = array<i64: 1, 1>, scalar_prefetch = 0 : i64, scratch_operands = 1 : i64, tpu.core_type = #tpu.core_type<tc>, window_params = [{transform_indices = @transform_0, window_bounds = array<i64: 2, 8, 768>}, {transform_indices = @transform_1, window_bounds = array<i64: 768, 128>}, {pipeline_mode = #tpu.pipeline_mode<synchronous>, transform_indices = @transform_2, window_bounds = array<i64: 1, 128>}, {pipeline_mode = #tpu.pipeline_mode<synchronous>, transform_indices = @transform_3, window_bounds = array<i64: 8, 128>}, {pipeline_mode = #tpu.pipeline_mode<synchronous>, transform_indices = @transform_4, window_bounds = array<i64: 1, 128>}, {pipeline_mode = #tpu.pipeline_mode<synchronous>, transform_indices = @transform_5, window_bounds = array<i64: 1, 128>}, {pipeline_mode = #tpu.pipeline_mode<synchronous>, transform_indices = @transform_6, window_bounds = array<i64: 128, 384>}, {pipeline_mode = #tpu.pipeline_mode<synchronous>, transform_indices = @transform_7, window_bounds = array<i64: 1, 384>}, {pipeline_mode = #tpu.pipeline_mode<synchronous>, transform_indices = @transform_8, window_bounds = array<i64: 128, 128>}, {pipeline_mode = #tpu.pipeline_mode<synchronous>, transform_indices = @transform_9, window_bounds = array<i64: 1, 128>}, {pipeline_mode = #tpu.pipeline_mode<synchronous>, transform_indices = @transform_10, window_bounds = array<i64: 1, 128>}, {pipeline_mode = #tpu.pipeline_mode<synchronous>, transform_indices = @transform_11, window_bounds = array<i64: 1, 128>}, {pipeline_mode = #tpu.pipeline_mode<synchronous>, transform_indices = @transform_12, window_bounds = array<i64: 128, 512>}, {pipeline_mode = #tpu.pipeline_mode<synchronous>, transform_indices = @transform_13, window_bounds = array<i64: 1, 512>}, {pipeline_mode = #tpu.pipeline_mode<synchronous>, transform_indices = @transform_14, window_bounds = array<i64: 512, 128>}, {pipeline_mode = #tpu.pipeline_mode<synchronous>, transform_indices = @transform_15, window_bounds = array<i64: 1, 128>}, {pipeline_mode = #tpu.pipeline_mode<synchronous>, transform_indices = @transform_16, window_bounds = array<i64: 8, 128>}, {transform_indices = @transform_17, window_bounds = array<i64: 1>}, {transform_indices = @transform_18, window_bounds = array<i64: 2, 2, 128>}, {transform_indices = @transform_19, window_bounds = array<i64: 2, 2, 8>}]} {
    %c0_i32 = arith.constant 0 : i32
    %0 = arith.cmpi eq, %arg1, %c0_i32 : i32
    %1 = arith.extui %0 : i1 to i32
    %c0_i32_0 = arith.constant 0 : i32
    %2 = arith.cmpi ne, %1, %c0_i32_0 : i32
    scf.if %2 {
      %cst_11 = arith.constant 0.000000e+00 : f32
      %14 = vector.broadcast %cst_11 : f32 to vector<16x128xf32>
      %c0_12 = arith.constant 0 : index
      %c0_13 = arith.constant 0 : index
      %15 = vector.load %arg22[%c0_12, %c0_13] : memref<16x128xf32, #tpu.memory_space<vmem>>, vector<16x128xf32>
      tpu.vector_store %arg22[%c0_12, %c0_13], %14 {strides = array<i32>} : memref<16x128xf32, #tpu.memory_space<vmem>>, vector<16x128xf32>,
    } else {
    }
    %c0 = arith.constant 0 : index
    %c0_1 = arith.constant 0 : index
    %c0_2 = arith.constant 0 : index
    %3 = vector.load %arg2[%c0, %c0_1, %c0_2] : memref<2x8x768xf32, #tpu.memory_space<vmem>>, vector<2x8x768xf32>
    %4 = vector.shape_cast %3 : vector<2x8x768xf32> to vector<16x768xf32>
    %5 = arith.truncf %4 : vector<16x768xf32> to vector<16x768xbf16>
    %c0_3 = arith.constant 0 : index
    %c0_4 = arith.constant 0 : index
    %6 = vector.load %arg22[%c0_3, %c0_4] : memref<16x128xf32, #tpu.memory_space<vmem>>, vector<16x128xf32>
    %c0_5 = arith.constant 0 : index
    %c0_6 = arith.constant 0 : index
    %7 = vector.load %arg3[%c0_5, %c0_6] : memref<768x128xbf16, #tpu.memory_space<vmem>>, vector<768x128xbf16>
    %cst = arith.constant dense<0.000000e+00> : vector<16x128xf32>
    %8 = tpu.matmul %5, %7, %cst {dimension_numbers = #tpu.dot_dimension_numbers<[1], [0], [0], [1], [0, 0, 1, 1], [], []>} : vector<16x768xbf16>, vector<768x128xbf16>, vector<16x128xf32> -> vector<16x128xf32>
    %9 = arith.addf %6, %8 : vector<16x128xf32>
    %c0_7 = arith.constant 0 : index
    %c0_8 = arith.constant 0 : index
    %10 = vector.load %arg22[%c0_7, %c0_8] : memref<16x128xf32, #tpu.memory_space<vmem>>, vector<16x128xf32>
    tpu.vector_store %arg22[%c0_7, %c0_8], %9 {strides = array<i32>} : memref<16x128xf32, #tpu.memory_space<vmem>>, vector<16x128xf32>,
    %c0_i32_9 = arith.constant 0 : i32
    %11 = arith.cmpi eq, %arg1, %c0_i32_9 : i32
    %12 = arith.extui %11 : i1 to i32
    %c0_i32_10 = arith.constant 0 : i32
    %13 = arith.cmpi ne, %12, %c0_i32_10 : i32
    scf.if %13 {
      %c0_11 = arith.constant 0 : index
      %c0_12 = arith.constant 0 : index
      %14 = vector.load %arg22[%c0_11, %c0_12] : memref<16x128xf32, #tpu.memory_space<vmem>>, vector<16x128xf32>
      %c0_13 = arith.constant 0 : index
      %c0_14 = arith.constant 0 : index
      %15 = vector.load %arg4[%c0_13, %c0_14] : memref<1x128xf32, #tpu.memory_space<vmem>>, vector<1x128xf32>
      %16 = vector.broadcast %15 : vector<1x128xf32> to vector<16x128xf32>
      %17 = arith.addf %14, %16 : vector<16x128xf32>
      %18 = vector.shape_cast %17 : vector<16x128xf32> to vector<2x8x128xf32>
      %cst_15 = arith.constant dense<0.000000e+00> : vector<2x128xf32>
      %19 = vector.multi_reduction <add>, %18, %cst_15 [1] : vector<2x8x128xf32> to vector<2x128xf32>
      %cst_16 = arith.constant 8.000000e+00 : f32
      %20 = vector.broadcast %cst_16 : f32 to vector<2x128xf32>
      %21 = arith.divf %19, %20 : vector<2x128xf32>
      %c0_17 = arith.constant 0 : index
      %c0_18 = arith.constant 0 : index
      %22 = vector.load %arg5[%c0_17, %c0_18] : memref<8x128xf32, #tpu.memory_space<vmem>>, vector<8x128xf32>
      %23 = vector.shape_cast %22 : vector<8x128xf32> to vector<1x8x128xf32>
      %24 = vector.broadcast %23 : vector<1x8x128xf32> to vector<2x8x128xf32>
      %25 = arith.addf %18, %24 : vector<2x8x128xf32>
      %c0_19 = arith.constant 0 : index
      %c0_20 = arith.constant 0 : index
      %26 = vector.load %arg6[%c0_19, %c0_20] : memref<1x128xf32, #tpu.memory_space<vmem>>, vector<1x128xf32>
      %c0_21 = arith.constant 0 : index
      %c0_22 = arith.constant 0 : index
      %27 = vector.load %arg7[%c0_21, %c0_22] : memref<1x128xf32, #tpu.memory_space<vmem>>, vector<1x128xf32>
      %cst_23 = arith.constant dense<0.000000e+00> : vector<2x8xf32>
      %28 = vector.multi_reduction <add>, %25, %cst_23 [2] : vector<2x8x128xf32> to vector<2x8xf32>
      %29 = vector.shape_cast %28 : vector<2x8xf32> to vector<2x8x1xf32>
      %cst_24 = arith.constant 1.280000e+02 : f32
      %30 = vector.broadcast %cst_24 : f32 to vector<2x8x1xf32>
      %31 = arith.divf %29, %30 : vector<2x8x1xf32>
      %32 = vector.broadcast %31 : vector<2x8x1xf32> to vector<2x8x128xf32>
      %33 = arith.subf %25, %32 : vector<2x8x128xf32>
      %34 = arith.mulf %33, %33 : vector<2x8x128xf32>
      %cst_25 = arith.constant dense<0.000000e+00> : vector<2x8xf32>
      %35 = vector.multi_reduction <add>, %34, %cst_25 [2] : vector<2x8x128xf32> to vector<2x8xf32>
      %36 = vector.shape_cast %35 : vector<2x8xf32> to vector<2x8x1xf32>
      %cst_26 = arith.constant 1.280000e+02 : f32
      %37 = vector.broadcast %cst_26 : f32 to vector<2x8x1xf32>
      %38 = arith.divf %36, %37 : vector<2x8x1xf32>
      %39 = vector.broadcast %31 : vector<2x8x1xf32> to vector<2x8x128xf32>
      %40 = arith.subf %25, %39 : vector<2x8x128xf32>
      %cst_27 = arith.constant 9.99999996E-13 : f32
      %41 = vector.broadcast %cst_27 : f32 to vector<2x8x1xf32>
      %42 = arith.addf %38, %41 : vector<2x8x1xf32>
      %43 = math.rsqrt %42 : vector<2x8x1xf32>
      %44 = vector.broadcast %43 : vector<2x8x1xf32> to vector<2x8x128xf32>
      %45 = arith.mulf %40, %44 : vector<2x8x128xf32>
      %46 = vector.shape_cast %26 : vector<1x128xf32> to vector<1x1x128xf32>
      %47 = vector.broadcast %46 : vector<1x1x128xf32> to vector<2x8x128xf32>
      %48 = arith.mulf %47, %45 : vector<2x8x128xf32>
      %49 = vector.shape_cast %27 : vector<1x128xf32> to vector<1x1x128xf32>
      %50 = vector.broadcast %49 : vector<1x1x128xf32> to vector<2x8x128xf32>
      %51 = arith.addf %48, %50 : vector<2x8x128xf32>
      %52 = vector.shape_cast %51 : vector<2x8x128xf32> to vector<16x128xf32>
      %53 = arith.truncf %52 : vector<16x128xf32> to vector<16x128xbf16>
      %c0_28 = arith.constant 0 : index
      %c0_29 = arith.constant 0 : index
      %54 = vector.load %arg8[%c0_28, %c0_29] : memref<128x384xbf16, #tpu.memory_space<vmem>>, vector<128x384xbf16>
      %cst_30 = arith.constant dense<0.000000e+00> : vector<16x384xf32>
      %55 = tpu.matmul %53, %54, %cst_30 {dimension_numbers = #tpu.dot_dimension_numbers<[1], [0], [0], [1], [0, 0, 1, 1], [], []>} : vector<16x128xbf16>, vector<128x384xbf16>, vector<16x384xf32> -> vector<16x384xf32>
      %c0_31 = arith.constant 0 : index
      %c0_32 = arith.constant 0 : index
      %56 = vector.load %arg9[%c0_31, %c0_32] : memref<1x384xf32, #tpu.memory_space<vmem>>, vector<1x384xf32>
      %57 = vector.broadcast %56 : vector<1x384xf32> to vector<16x384xf32>
      %58 = arith.addf %55, %57 : vector<16x384xf32>
      %59 = vector.shape_cast %58 : vector<16x384xf32> to vector<2x8x384xf32>
      %60 = vector.extract_strided_slice %59 {offsets = [0, 0, 0], sizes = [2, 8, 128], strides = [1, 1, 1]} : vector<2x8x384xf32> to vector<2x8x128xf32>
      %61 = vector.extract_strided_slice %59 {offsets = [0, 0, 128], sizes = [2, 8, 128], strides = [1, 1, 1]} : vector<2x8x384xf32> to vector<2x8x128xf32>
      %62 = vector.extract_strided_slice %59 {offsets = [0, 0, 256], sizes = [2, 8, 128], strides = [1, 1, 1]} : vector<2x8x384xf32> to vector<2x8x128xf32>
      %63 = arith.truncf %60 : vector<2x8x128xf32> to vector<2x8x128xbf16>
      %64 = arith.truncf %61 : vector<2x8x128xf32> to vector<2x8x128xbf16>
      %65 = arith.truncf %62 : vector<2x8x128xf32> to vector<2x8x128xbf16>
      %66 = tpu.iota {dimensions = array<i32: 2>} : vector<1x1x128xi32>
      %cst_33 = arith.constant 0.000000e+00 : f32
      %67 = vector.broadcast %cst_33 : f32 to vector<2x8x128xf32>
      %c0_i32_34 = arith.constant 0 : i32
      %68 = vector.broadcast %c0_i32_34 : i32 to vector<1x1x128xi32>
      %69 = arith.cmpi sge, %66, %68 : vector<1x1x128xi32>
      %c64_i32 = arith.constant 64 : i32
      %70 = vector.broadcast %c64_i32 : i32 to vector<1x1x128xi32>
      %71 = arith.cmpi slt, %66, %70 : vector<1x1x128xi32>
      %72 = arith.andi %69, %71 : vector<1x1x128xi1>
      %cst_35 = arith.constant 0.000000e+00 : bf16
      %73 = vector.broadcast %cst_35 : bf16 to vector<2x8x128xbf16>
      %74 = vector.shape_cast %72 : vector<1x1x128xi1> to vector<1x1x128xi1>
      %75 = vector.broadcast %74 : vector<1x1x128xi1> to vector<2x8x128xi1>
      %76 = arith.select %75, %63, %73 : vector<2x8x128xi1>, vector<2x8x128xbf16>
      "tpu.trace_start"() <{level = 10 : i32, message = "bqd,bkd->bqk"}> : () -> ()
      %cst_36 = arith.constant dense<0.000000e+00> : vector<2x8x8xf32>
      %77 = tpu.matmul %76, %64, %cst_36 {dimension_numbers = #tpu.dot_dimension_numbers<[2], [2], [1], [1], [0, 0, 0, 1, 1, 1], [0], [0]>} : vector<2x8x128xbf16>, vector<2x8x128xbf16>, vector<2x8x8xf32> -> vector<2x8x8xf32>
      "tpu.trace_stop"() : () -> ()
      %cst_37 = arith.constant 1.250000e-01 : f32
      %78 = vector.broadcast %cst_37 : f32 to vector<2x8x8xf32>
      %79 = arith.mulf %77, %78 : vector<2x8x8xf32>
      %cst_38 = arith.constant dense<0xFF800000> : vector<2x8xf32>
      %80 = vector.multi_reduction <maximumf>, %79, %cst_38 [2] : vector<2x8x8xf32> to vector<2x8xf32>
      %81 = vector.shape_cast %80 : vector<2x8xf32> to vector<2x8x1xf32>
      %82 = vector.broadcast %81 : vector<2x8x1xf32> to vector<2x8x8xf32>
      %83 = arith.subf %79, %82 : vector<2x8x8xf32>
      %84 = math.exp %83 : vector<2x8x8xf32>
      %cst_39 = arith.constant dense<0.000000e+00> : vector<2x8xf32>
      %85 = vector.multi_reduction <add>, %84, %cst_39 [2] : vector<2x8x8xf32> to vector<2x8xf32>
      %86 = vector.shape_cast %85 : vector<2x8xf32> to vector<2x8x1xf32>
      %87 = vector.broadcast %86 : vector<2x8x1xf32> to vector<2x8x8xf32>
      %88 = arith.divf %84, %87 : vector<2x8x8xf32>
      %cst_40 = arith.constant 0.000000e+00 : bf16
      %89 = vector.broadcast %cst_40 : bf16 to vector<2x8x128xbf16>
      %90 = vector.shape_cast %72 : vector<1x1x128xi1> to vector<1x1x128xi1>
      %91 = vector.broadcast %90 : vector<1x1x128xi1> to vector<2x8x128xi1>
      %92 = arith.select %91, %65, %89 : vector<2x8x128xi1>, vector<2x8x128xbf16>
      %93 = arith.truncf %88 : vector<2x8x8xf32> to vector<2x8x8xbf16>
      "tpu.trace_start"() <{level = 10 : i32, message = "bqk,bkd->bqd"}> : () -> ()
      %cst_41 = arith.constant dense<0.000000e+00> : vector<2x8x128xf32>
      %94 = tpu.matmul %93, %92, %cst_41 {dimension_numbers = #tpu.dot_dimension_numbers<[2], [1], [1], [2], [0, 0, 0, 1, 1, 2], [0], [0]>} : vector<2x8x8xbf16>, vector<2x8x128xbf16>, vector<2x8x128xf32> -> vector<2x8x128xf32>
      "tpu.trace_stop"() : () -> ()
      %95 = arith.addf %67, %94 : vector<2x8x128xf32>
      %c64_i32_42 = arith.constant 64 : i32
      %96 = vector.broadcast %c64_i32_42 : i32 to vector<1x1x128xi32>
      %97 = arith.cmpi sge, %66, %96 : vector<1x1x128xi32>
      %c128_i32 = arith.constant 128 : i32
      %98 = vector.broadcast %c128_i32 : i32 to vector<1x1x128xi32>
      %99 = arith.cmpi slt, %66, %98 : vector<1x1x128xi32>
      %100 = arith.andi %97, %99 : vector<1x1x128xi1>
      %cst_43 = arith.constant 0.000000e+00 : bf16
      %101 = vector.broadcast %cst_43 : bf16 to vector<2x8x128xbf16>
      %102 = vector.shape_cast %100 : vector<1x1x128xi1> to vector<1x1x128xi1>
      %103 = vector.broadcast %102 : vector<1x1x128xi1> to vector<2x8x128xi1>
      %104 = arith.select %103, %63, %101 : vector<2x8x128xi1>, vector<2x8x128xbf16>
      "tpu.trace_start"() <{level = 10 : i32, message = "bqd,bkd->bqk"}> : () -> ()
      %cst_44 = arith.constant dense<0.000000e+00> : vector<2x8x8xf32>
      %105 = tpu.matmul %104, %64, %cst_44 {dimension_numbers = #tpu.dot_dimension_numbers<[2], [2], [1], [1], [0, 0, 0, 1, 1, 1], [0], [0]>} : vector<2x8x128xbf16>, vector<2x8x128xbf16>, vector<2x8x8xf32> -> vector<2x8x8xf32>
      "tpu.trace_stop"() : () -> ()
      %cst_45 = arith.constant 1.250000e-01 : f32
      %106 = vector.broadcast %cst_45 : f32 to vector<2x8x8xf32>
      %107 = arith.mulf %105, %106 : vector<2x8x8xf32>
      %cst_46 = arith.constant dense<0xFF800000> : vector<2x8xf32>
      %108 = vector.multi_reduction <maximumf>, %107, %cst_46 [2] : vector<2x8x8xf32> to vector<2x8xf32>
      %109 = vector.shape_cast %108 : vector<2x8xf32> to vector<2x8x1xf32>
      %110 = vector.broadcast %109 : vector<2x8x1xf32> to vector<2x8x8xf32>
      %111 = arith.subf %107, %110 : vector<2x8x8xf32>
      %112 = math.exp %111 : vector<2x8x8xf32>
      %cst_47 = arith.constant dense<0.000000e+00> : vector<2x8xf32>
      %113 = vector.multi_reduction <add>, %112, %cst_47 [2] : vector<2x8x8xf32> to vector<2x8xf32>
      %114 = vector.shape_cast %113 : vector<2x8xf32> to vector<2x8x1xf32>
      %115 = vector.broadcast %114 : vector<2x8x1xf32> to vector<2x8x8xf32>
      %116 = arith.divf %112, %115 : vector<2x8x8xf32>
      %cst_48 = arith.constant 0.000000e+00 : bf16
      %117 = vector.broadcast %cst_48 : bf16 to vector<2x8x128xbf16>
      %118 = vector.shape_cast %100 : vector<1x1x128xi1> to vector<1x1x128xi1>
      %119 = vector.broadcast %118 : vector<1x1x128xi1> to vector<2x8x128xi1>
      %120 = arith.select %119, %65, %117 : vector<2x8x128xi1>, vector<2x8x128xbf16>
      %121 = arith.truncf %116 : vector<2x8x8xf32> to vector<2x8x8xbf16>
      "tpu.trace_start"() <{level = 10 : i32, message = "bqk,bkd->bqd"}> : () -> ()
      %cst_49 = arith.constant dense<0.000000e+00> : vector<2x8x128xf32>
      %122 = tpu.matmul %121, %120, %cst_49 {dimension_numbers = #tpu.dot_dimension_numbers<[2], [1], [1], [2], [0, 0, 0, 1, 1, 2], [0], [0]>} : vector<2x8x8xbf16>, vector<2x8x128xbf16>, vector<2x8x128xf32> -> vector<2x8x128xf32>
      "tpu.trace_stop"() : () -> ()
      %123 = arith.addf %95, %122 : vector<2x8x128xf32>
      %124 = vector.shape_cast %123 : vector<2x8x128xf32> to vector<16x128xf32>
      %125 = arith.truncf %124 : vector<16x128xf32> to vector<16x128xbf16>
      %c0_50 = arith.constant 0 : index
      %c0_51 = arith.constant 0 : index
      %126 = vector.load %arg10[%c0_50, %c0_51] : memref<128x128xbf16, #tpu.memory_space<vmem>>, vector<128x128xbf16>
      %cst_52 = arith.constant dense<0.000000e+00> : vector<16x128xf32>
      %127 = tpu.matmul %125, %126, %cst_52 {dimension_numbers = #tpu.dot_dimension_numbers<[1], [0], [0], [1], [0, 0, 1, 1], [], []>} : vector<16x128xbf16>, vector<128x128xbf16>, vector<16x128xf32> -> vector<16x128xf32>
      %c0_53 = arith.constant 0 : index
      %c0_54 = arith.constant 0 : index
      %128 = vector.load %arg11[%c0_53, %c0_54] : memref<1x128xf32, #tpu.memory_space<vmem>>, vector<1x128xf32>
      %129 = vector.broadcast %128 : vector<1x128xf32> to vector<16x128xf32>
      %130 = arith.addf %127, %129 : vector<16x128xf32>
      %131 = vector.shape_cast %130 : vector<16x128xf32> to vector<2x8x128xf32>
      %132 = arith.addf %25, %131 : vector<2x8x128xf32>
      %c0_55 = arith.constant 0 : index
      %c0_56 = arith.constant 0 : index
      %133 = vector.load %arg12[%c0_55, %c0_56] : memref<1x128xf32, #tpu.memory_space<vmem>>, vector<1x128xf32>
      %c0_57 = arith.constant 0 : index
      %c0_58 = arith.constant 0 : index
      %134 = vector.load %arg13[%c0_57, %c0_58] : memref<1x128xf32, #tpu.memory_space<vmem>>, vector<1x128xf32>
      %cst_59 = arith.constant dense<0.000000e+00> : vector<2x8xf32>
      %135 = vector.multi_reduction <add>, %132, %cst_59 [2] : vector<2x8x128xf32> to vector<2x8xf32>
      %136 = vector.shape_cast %135 : vector<2x8xf32> to vector<2x8x1xf32>
      %cst_60 = arith.constant 1.280000e+02 : f32
      %137 = vector.broadcast %cst_60 : f32 to vector<2x8x1xf32>
      %138 = arith.divf %136, %137 : vector<2x8x1xf32>
      %139 = vector.broadcast %138 : vector<2x8x1xf32> to vector<2x8x128xf32>
      %140 = arith.subf %132, %139 : vector<2x8x128xf32>
      %141 = arith.mulf %140, %140 : vector<2x8x128xf32>
      %cst_61 = arith.constant dense<0.000000e+00> : vector<2x8xf32>
      %142 = vector.multi_reduction <add>, %141, %cst_61 [2] : vector<2x8x128xf32> to vector<2x8xf32>
      %143 = vector.shape_cast %142 : vector<2x8xf32> to vector<2x8x1xf32>
      %cst_62 = arith.constant 1.280000e+02 : f32
      %144 = vector.broadcast %cst_62 : f32 to vector<2x8x1xf32>
      %145 = arith.divf %143, %144 : vector<2x8x1xf32>
      %146 = vector.broadcast %138 : vector<2x8x1xf32> to vector<2x8x128xf32>
      %147 = arith.subf %132, %146 : vector<2x8x128xf32>
      %cst_63 = arith.constant 9.99999996E-13 : f32
      %148 = vector.broadcast %cst_63 : f32 to vector<2x8x1xf32>
      %149 = arith.addf %145, %148 : vector<2x8x1xf32>
      %150 = math.rsqrt %149 : vector<2x8x1xf32>
      %151 = vector.broadcast %150 : vector<2x8x1xf32> to vector<2x8x128xf32>
      %152 = arith.mulf %147, %151 : vector<2x8x128xf32>
      %153 = vector.shape_cast %133 : vector<1x128xf32> to vector<1x1x128xf32>
      %154 = vector.broadcast %153 : vector<1x1x128xf32> to vector<2x8x128xf32>
      %155 = arith.mulf %154, %152 : vector<2x8x128xf32>
      %156 = vector.shape_cast %134 : vector<1x128xf32> to vector<1x1x128xf32>
      %157 = vector.broadcast %156 : vector<1x1x128xf32> to vector<2x8x128xf32>
      %158 = arith.addf %155, %157 : vector<2x8x128xf32>
      %159 = vector.shape_cast %158 : vector<2x8x128xf32> to vector<16x128xf32>
      %160 = arith.truncf %159 : vector<16x128xf32> to vector<16x128xbf16>
      %c0_64 = arith.constant 0 : index
      %c0_65 = arith.constant 0 : index
      %161 = vector.load %arg14[%c0_64, %c0_65] : memref<128x512xbf16, #tpu.memory_space<vmem>>, vector<128x512xbf16>
      %cst_66 = arith.constant dense<0.000000e+00> : vector<16x512xf32>
      %162 = tpu.matmul %160, %161, %cst_66 {dimension_numbers = #tpu.dot_dimension_numbers<[1], [0], [0], [1], [0, 0, 1, 1], [], []>} : vector<16x128xbf16>, vector<128x512xbf16>, vector<16x512xf32> -> vector<16x512xf32>
      %c0_67 = arith.constant 0 : index
      %c0_68 = arith.constant 0 : index
      %163 = vector.load %arg15[%c0_67, %c0_68] : memref<1x512xf32, #tpu.memory_space<vmem>>, vector<1x512xf32>
      %164 = vector.broadcast %163 : vector<1x512xf32> to vector<16x512xf32>
      %165 = arith.addf %162, %164 : vector<16x512xf32>
      %cst_69 = arith.constant -1.702000e+00 : f32
      %166 = vector.broadcast %cst_69 : f32 to vector<16x512xf32>
      %167 = arith.mulf %166, %165 : vector<16x512xf32>
      %168 = math.exp %167 : vector<16x512xf32>
      %cst_70 = arith.constant 1.000000e+00 : f32
      %169 = vector.broadcast %cst_70 : f32 to vector<16x512xf32>
      %170 = arith.addf %169, %168 : vector<16x512xf32>
      %171 = arith.divf %165, %170 : vector<16x512xf32>
      %172 = arith.truncf %171 : vector<16x512xf32> to vector<16x512xbf16>
      %c0_71 = arith.constant 0 : index
      %c0_72 = arith.constant 0 : index
      %173 = vector.load %arg16[%c0_71, %c0_72] : memref<512x128xbf16, #tpu.memory_space<vmem>>, vector<512x128xbf16>
      %cst_73 = arith.constant dense<0.000000e+00> : vector<16x128xf32>
      %174 = tpu.matmul %172, %173, %cst_73 {dimension_numbers = #tpu.dot_dimension_numbers<[1], [0], [0], [1], [0, 0, 1, 1], [], []>} : vector<16x512xbf16>, vector<512x128xbf16>, vector<16x128xf32> -> vector<16x128xf32>
      %c0_74 = arith.constant 0 : index
      %c0_75 = arith.constant 0 : index
      %175 = vector.load %arg17[%c0_74, %c0_75] : memref<1x128xf32, #tpu.memory_space<vmem>>, vector<1x128xf32>
      %176 = vector.broadcast %175 : vector<1x128xf32> to vector<16x128xf32>
      %177 = arith.addf %174, %176 : vector<16x128xf32>
      %178 = vector.shape_cast %177 : vector<16x128xf32> to vector<2x8x128xf32>
      %179 = arith.addf %132, %178 : vector<2x8x128xf32>
      %cst_76 = arith.constant dense<0.000000e+00> : vector<2x128xf32>
      %180 = vector.multi_reduction <add>, %179, %cst_76 [1] : vector<2x8x128xf32> to vector<2x128xf32>
      %cst_77 = arith.constant 8.000000e+00 : f32
      %181 = vector.broadcast %cst_77 : f32 to vector<2x128xf32>
      %182 = arith.divf %180, %181 : vector<2x128xf32>
      %183 = arith.mulf %182, %182 : vector<2x128xf32>
      %cst_78 = arith.constant dense<0.000000e+00> : vector<2xf32>
      %184 = vector.multi_reduction <add>, %183, %cst_78 [1] : vector<2x128xf32> to vector<2xf32>
      %185 = vector.shape_cast %184 : vector<2xf32> to vector<2x1xf32>
      %cst_79 = arith.constant 9.99999996E-13 : f32
      %186 = vector.broadcast %cst_79 : f32 to vector<2x1xf32>
      %187 = arith.addf %185, %186 : vector<2x1xf32>
      %188 = math.rsqrt %187 : vector<2x1xf32>
      %189 = vector.broadcast %188 : vector<2x1xf32> to vector<2x128xf32>
      %190 = arith.mulf %182, %189 : vector<2x128xf32>
      %191 = arith.mulf %21, %21 : vector<2x128xf32>
      %cst_80 = arith.constant dense<0.000000e+00> : vector<2xf32>
      %192 = vector.multi_reduction <add>, %191, %cst_80 [1] : vector<2x128xf32> to vector<2xf32>
      %193 = vector.shape_cast %192 : vector<2xf32> to vector<2x1xf32>
      %cst_81 = arith.constant 9.99999996E-13 : f32
      %194 = vector.broadcast %cst_81 : f32 to vector<2x1xf32>
      %195 = arith.addf %193, %194 : vector<2x1xf32>
      %196 = math.rsqrt %195 : vector<2x1xf32>
      %197 = vector.broadcast %196 : vector<2x1xf32> to vector<2x128xf32>
      %198 = arith.mulf %21, %197 : vector<2x128xf32>
      %199 = arith.mulf %198, %198 : vector<2x128xf32>
      %cst_82 = arith.constant dense<0.000000e+00> : vector<2xf32>
      %200 = vector.multi_reduction <add>, %199, %cst_82 [1] : vector<2x128xf32> to vector<2xf32>
      %201 = vector.shape_cast %200 : vector<2xf32> to vector<2x1xf32>
      %202 = arith.mulf %190, %198 : vector<2x128xf32>
      %203 = vector.broadcast %201 : vector<2x1xf32> to vector<2x128xf32>
      %204 = arith.divf %202, %203 : vector<2x128xf32>
      %205 = arith.mulf %204, %198 : vector<2x128xf32>
      %206 = arith.subf %190, %205 : vector<2x128xf32>
      %207 = arith.addf %198, %206 : vector<2x128xf32>
      %c0_83 = arith.constant 0 : index
      %208 = memref.load %arg19[%c0_83] : memref<1xf32, #tpu.memory_space<smem>>
      %209 = tpu.concatenate %207, %190 in 0 : vector<2x128xf32>, vector<2x128xf32> -> vector<4x128xf32>
      %210 = arith.truncf %209 : vector<4x128xf32> to vector<4x128xbf16>
      %c0_84 = arith.constant 0 : index
      %c0_85 = arith.constant 0 : index
      %211 = vector.load %arg18[%c0_84, %c0_85] : memref<8x128xbf16, #tpu.memory_space<vmem>>, vector<8x128xbf16>
      %cst_86 = arith.constant dense<0.000000e+00> : vector<4x8xf32>
      %212 = tpu.matmul %210, %211, %cst_86 {dimension_numbers = #tpu.dot_dimension_numbers<[1], [1], [0], [0], [0, 0, 1, 0], [], []>} : vector<4x128xbf16>, vector<8x128xbf16>, vector<4x8xf32> -> vector<4x8xf32>
      %213 = vector.broadcast %208 : f32 to vector<4x8xf32>
      %214 = arith.mulf %213, %212 : vector<4x8xf32>
      %215 = vector.shape_cast %190 : vector<2x128xf32> to vector<2x1x128xf32>
      %c0_87 = arith.constant 0 : index
      %c0_88 = arith.constant 0 : index
      %c0_89 = arith.constant 0 : index
      %216 = vector.load %arg20[%c0_87, %c0_88, %c0_89] : memref<2x2x128xf32, #tpu.memory_space<vmem>>, vector<2x1x128xf32>
      tpu.vector_store %arg20[%c0_87, %c0_88, %c0_89], %215 {strides = array<i32>} : memref<2x2x128xf32, #tpu.memory_space<vmem>>, vector<2x1x128xf32>,
      %217 = vector.shape_cast %198 : vector<2x128xf32> to vector<2x1x128xf32>
      %c0_90 = arith.constant 0 : index
      %c1 = arith.constant 1 : index
      %c0_91 = arith.constant 0 : index
      %218 = vector.load %arg20[%c0_90, %c1, %c0_91] : memref<2x2x128xf32, #tpu.memory_space<vmem>>, vector<2x1x128xf32>
      tpu.vector_store %arg20[%c0_90, %c1, %c0_91], %217 {strides = array<i32>} : memref<2x2x128xf32, #tpu.memory_space<vmem>>, vector<2x1x128xf32>,
      %219 = vector.extract_strided_slice %214 {offsets = [0, 0], sizes = [2, 8], strides = [1, 1]} : vector<4x8xf32> to vector<2x8xf32>
      %220 = vector.shape_cast %219 : vector<2x8xf32> to vector<2x1x8xf32>
      %c0_92 = arith.constant 0 : index
      %c0_93 = arith.constant 0 : index
      %c0_94 = arith.constant 0 : index
      %221 = vector.load %arg21[%c0_92, %c0_93, %c0_94] : memref<2x2x8xf32, #tpu.memory_space<vmem>>, vector<2x1x8xf32>
      tpu.vector_store %arg21[%c0_92, %c0_93, %c0_94], %220 {strides = array<i32>} : memref<2x2x8xf32, #tpu.memory_space<vmem>>, vector<2x1x8xf32>,
      %222 = vector.extract_strided_slice %214 {offsets = [2, 0], sizes = [2, 8], strides = [1, 1]} : vector<4x8xf32> to vector<2x8xf32>
      %223 = vector.shape_cast %222 : vector<2x8xf32> to vector<2x1x8xf32>
      %c0_95 = arith.constant 0 : index
      %c1_96 = arith.constant 1 : index
      %c0_97 = arith.constant 0 : index
      %224 = vector.load %arg21[%c0_95, %c1_96, %c0_97] : memref<2x2x8xf32, #tpu.memory_space<vmem>>, vector<2x1x8xf32>
      tpu.vector_store %arg21[%c0_95, %c1_96, %c0_97], %223 {strides = array<i32>} : memref<2x2x8xf32, #tpu.memory_space<vmem>>, vector<2x1x8xf32>,
    } else {
    }
    return
  }
  func.func @transform_0(%arg0: i32, %arg1: i32) -> (i32, i32, i32) {
    %c0_i32 = arith.constant 0 : i32
    %c0_i32_0 = arith.constant 0 : i32
    return %arg0, %c0_i32, %arg1 : i32, i32, i32
  }
  func.func @transform_1(%arg0: i32, %arg1: i32) -> (i32, i32) {
    %c0_i32 = arith.constant 0 : i32
    %c0_i32_0 = arith.constant 0 : i32
    return %arg1, %c0_i32 : i32, i32
  }
  func.func @transform_2(%arg0: i32, %arg1: i32) -> (i32, i32) {
    %c0_i32 = arith.constant 0 : i32
    %c0_i32_0 = arith.constant 0 : i32
    %c0_i32_1 = arith.constant 0 : i32
    return %c0_i32, %c0_i32_0 : i32, i32
  }
  func.func @transform_3(%arg0: i32, %arg1: i32) -> (i32, i32) {
    %c0_i32 = arith.constant 0 : i32
    %c0_i32_0 = arith.constant 0 : i32
    %c0_i32_1 = arith.constant 0 : i32
    return %c0_i32, %c0_i32_0 : i32, i32
  }
  func.func @transform_4(%arg0: i32, %arg1: i32) -> (i32, i32) {
    %c0_i32 = arith.constant 0 : i32
    %c0_i32_0 = arith.constant 0 : i32
    %c0_i32_1 = arith.constant 0 : i32
    return %c0_i32, %c0_i32_0 : i32, i32
  }
  func.func @transform_5(%arg0: i32, %arg1: i32) -> (i32, i32) {
    %c0_i32 = arith.constant 0 : i32
    %c0_i32_0 = arith.constant 0 : i32
    %c0_i32_1 = arith.constant 0 : i32
    return %c0_i32, %c0_i32_0 : i32, i32
  }
  func.func @transform_6(%arg0: i32, %arg1: i32) -> (i32, i32) {
    %c0_i32 = arith.constant 0 : i32
    %c0_i32_0 = arith.constant 0 : i32
    %c0_i32_1 = arith.constant 0 : i32
    return %c0_i32, %c0_i32_0 : i32, i32
  }
  func.func @transform_7(%arg0: i32, %arg1: i32) -> (i32, i32) {
    %c0_i32 = arith.constant 0 : i32
    %c0_i32_0 = arith.constant 0 : i32
    %c0_i32_1 = arith.constant 0 : i32
    return %c0_i32, %c0_i32_0 : i32, i32
  }
  func.func @transform_8(%arg0: i32, %arg1: i32) -> (i32, i32) {
    %c0_i32 = arith.constant 0 : i32
    %c0_i32_0 = arith.constant 0 : i32
    %c0_i32_1 = arith.constant 0 : i32
    return %c0_i32, %c0_i32_0 : i32, i32
  }
  func.func @transform_9(%arg0: i32, %arg1: i32) -> (i32, i32) {
    %c0_i32 = arith.constant 0 : i32
    %c0_i32_0 = arith.constant 0 : i32
    %c0_i32_1 = arith.constant 0 : i32
    return %c0_i32, %c0_i32_0 : i32, i32
  }
  func.func @transform_10(%arg0: i32, %arg1: i32) -> (i32, i32) {
    %c0_i32 = arith.constant 0 : i32
    %c0_i32_0 = arith.constant 0 : i32
    %c0_i32_1 = arith.constant 0 : i32
    return %c0_i32, %c0_i32_0 : i32, i32
  }
  func.func @transform_11(%arg0: i32, %arg1: i32) -> (i32, i32) {
    %c0_i32 = arith.constant 0 : i32
    %c0_i32_0 = arith.constant 0 : i32
    %c0_i32_1 = arith.constant 0 : i32
    return %c0_i32, %c0_i32_0 : i32, i32
  }
  func.func @transform_12(%arg0: i32, %arg1: i32) -> (i32, i32) {
    %c0_i32 = arith.constant 0 : i32
    %c0_i32_0 = arith.constant 0 : i32
    %c0_i32_1 = arith.constant 0 : i32
    return %c0_i32, %c0_i32_0 : i32, i32
  }
  func.func @transform_13(%arg0: i32, %arg1: i32) -> (i32, i32) {
    %c0_i32 = arith.constant 0 : i32
    %c0_i32_0 = arith.constant 0 : i32
    %c0_i32_1 = arith.constant 0 : i32
    return %c0_i32, %c0_i32_0 : i32, i32
  }
  func.func @transform_14(%arg0: i32, %arg1: i32) -> (i32, i32) {
    %c0_i32 = arith.constant 0 : i32
    %c0_i32_0 = arith.constant 0 : i32
    %c0_i32_1 = arith.constant 0 : i32
    return %c0_i32, %c0_i32_0 : i32, i32
  }
  func.func @transform_15(%arg0: i32, %arg1: i32) -> (i32, i32) {
    %c0_i32 = arith.constant 0 : i32
    %c0_i32_0 = arith.constant 0 : i32
    %c0_i32_1 = arith.constant 0 : i32
    return %c0_i32, %c0_i32_0 : i32, i32
  }
  func.func @transform_16(%arg0: i32, %arg1: i32) -> (i32, i32) {
    %c0_i32 = arith.constant 0 : i32
    %c0_i32_0 = arith.constant 0 : i32
    %c0_i32_1 = arith.constant 0 : i32
    return %c0_i32, %c0_i32_0 : i32, i32
  }
  func.func @transform_17(%arg0: i32, %arg1: i32) -> i32 {
    %c0_i32 = arith.constant 0 : i32
    %c0_i32_0 = arith.constant 0 : i32
    return %c0_i32 : i32
  }
  func.func @transform_18(%arg0: i32, %arg1: i32) -> (i32, i32, i32) {
    %c0_i32 = arith.constant 0 : i32
    %c0_i32_0 = arith.constant 0 : i32
    %c0_i32_1 = arith.constant 0 : i32
    return %arg0, %c0_i32, %c0_i32_0 : i32, i32, i32
  }
  func.func @transform_19(%arg0: i32, %arg1: i32) -> (i32, i32, i32) {
    %c0_i32 = arith.constant 0 : i32
    %c0_i32_0 = arith.constant 0 : i32
    %c0_i32_1 = arith.constant 0 : i32
    return %arg0, %c0_i32, %c0_i32_0 : i32, i32, i32
  }
}

</mosaic_0001>

<llo_original>
// kernel: oti_forward.1
$region0: #{oti_forward.1}
  #allocation0 [shape = 'u32[]', space=smem, size = 0x4, offset = 0x4, fixed_abs, tag = 'smem constant byte address 0x4 - core index']
  #allocation1 [shape = 'u32[144,128]{1,0:T(1,128)}', space=vmem, size = 0x12000, scoped, tag = 'internal scratch']
  #allocation2 [shape = 'f32[16,128]{1,0:T(8,128)}', space=vmem, size = 0x2000, scoped, tag = 'scratch operand']
  #allocation3 [shape = 'f32[1]{0:T(128)S(6)}', space=smem, size = 0x200, scoped, tag = 'scoped memory for oti_forward.1']
  %s0 = inlined_call_operand.vmem [shape: f32[2,8,768], index: 0, kind: input, shape index: {}]
  %s1 = inlined_call_operand.vmem [shape: bf16[768,128], index: 1, kind: input, shape index: {}]
  %s2 = inlined_call_operand.vmem [shape: f32[1,128], index: 2, kind: input, shape index: {}]
  %s3 = inlined_call_operand.vmem [shape: f32[8,128], index: 3, kind: input, shape index: {}]
  %s4 = inlined_call_operand.hbm [shape: f32[1,128], index: 4, kind: input, shape index: {}]
  %s5 = inlined_call_operand.hbm [shape: f32[1,128], index: 5, kind: input, shape index: {}]
  %s6 = inlined_call_operand.hbm [shape: bf16[128,384], index: 6, kind: input, shape index: {}]
  %s7 = inlined_call_operand.vmem [shape: f32[1,384], index: 7, kind: input, shape index: {}]
  %s8 = inlined_call_operand.hbm [shape: bf16[128,128], index: 8, kind: input, shape index: {}]
  %s9 = inlined_call_operand.hbm [shape: f32[1,128], index: 9, kind: input, shape index: {}]
  %s10 = inlined_call_operand.hbm [shape: f32[1,128], index: 10, kind: input, shape index: {}]
  %s11 = inlined_call_operand.hbm [shape: f32[1,128], index: 11, kind: input, shape index: {}]
  %s12 = inlined_call_operand.vmem [shape: bf16[128,512], index: 12, kind: input, shape index: {}]
  %s13 = inlined_call_operand.vmem [shape: f32[1,512], index: 13, kind: input, shape index: {}]
  %s14 = inlined_call_operand.vmem [shape: bf16[512,128], index: 14, kind: input, shape index: {}]
  %s15 = inlined_call_operand.hbm [shape: f32[1,128], index: 15, kind: input, shape index: {}]
  %s16 = inlined_call_operand.vmem [shape: bf16[8,128], index: 16, kind: input, shape index: {}]
  %s17 = inlined_call_operand.<no memory space> [shape: f32[1], index: 17, kind: input, shape index: {}]
  %s18 = inlined_call_operand.vmem [shape: f32[2,2,128], index: 18, kind: output, shape index: {0}]
  %s19 = inlined_call_operand.vmem [shape: f32[2,2,8], index: 19, kind: output, shape index: {1}]
  %20 = xla_tuple %s18, %s19
  %s21 = sld [smem:[#allocation0]]
  $region130: #{oti_forward.1} parent=0
    _
  %s23 = ssub.s32 1, %s21
  %s24 = scalar_select 0, %s23, %s21
  %25 = sst [smem:[#allocation3]] %s17
  $region1: #{oti_forward.1} parent=0
    #allocation4 [shape = 'u8[512]{0}', space=vmem, size = 0x400, scoped, tag = 'input window, operand 4, single buffered']
    #allocation5 [shape = 's32[1]{0}', space=sflag, size = 0x4, scoped, tag = 'scoped memory for oti_forward.1']
    #allocation6 [shape = 'u8[512]{0}', space=vmem, size = 0x400, scoped, tag = 'input window, operand 5, single buffered']
    #allocation7 [shape = 's32[1]{0}', space=sflag, size = 0x4, scoped, tag = 'scoped memory for oti_forward.1']
    #allocation8 [shape = 'u8[98304]{0}', space=vmem, size = 0x18000, scoped, tag = 'input window, operand 6, single buffered']
    #allocation9 [shape = 'u8[32768]{0}', space=vmem, size = 0x8000, scoped, tag = 'input window, operand 8, single buffered']
    #allocation10 [shape = 's32[1]{0}', space=sflag, size = 0x4, scoped, tag = 'scoped memory for oti_forward.1']
    #allocation11 [shape = 'u8[512]{0}', space=vmem, size = 0x400, scoped, tag = 'input window, operand 9, single buffered']
    #allocation12 [shape = 'u8[512]{0}', space=vmem, size = 0x400, scoped, tag = 'input window, operand 10, single buffered']
    #allocation13 [shape = 's32[1]{0}', space=sflag, size = 0x4, scoped, tag = 'scoped memory for oti_forward.1']
    #allocation14 [shape = 'u8[512]{0}', space=vmem, size = 0x400, scoped, tag = 'input window, operand 11, single buffered']
    #allocation15 [shape = 'u8[512]{0}', space=vmem, size = 0x400, scoped, tag = 'input window, operand 15, single buffered']
    #allocation16 [shape = 's32[1]{0}', space=sflag, size = 0x4, scoped, tag = 'scoped memory for oti_forward.1']
    %26 = vsyncpa [#allocation5], 0
    %27 = vsyncpa [#allocation7], 0
    %28 = vsyncpa [#allocation10], 0
    %29 = vsyncpa [#allocation13], 0
    %30 = vsyncpa [#allocation16], 0
    // Predicated region
    $region2: #{oti_forward.1} parent=1 // pred_check
      _
    $region3: #{oti_forward.1} parent=1 // pred_check_branch
      %32 = sbr.rel (0) target = $region5
    $region4: #{oti_forward.1} parent=1 // pred_region
      _
    $region5: #{oti_forward.1} parent=1 // pred_fallthru
      _
    // Predicated region
    $region6: #{oti_forward.1} parent=1 // pred_check
      _
    $region7: #{oti_forward.1} parent=1 // pred_check_branch
      %34 = sbr.rel (0) target = $region9
    $region8: #{oti_forward.1} parent=1 // pred_region
      _
    $region9: #{oti_forward.1} parent=1 // pred_fallthru
      _
    // Predicated region
    $region10: #{oti_forward.1} parent=1 // pred_check
      _
    $region11: #{oti_forward.1} parent=1 // pred_check_branch
      %36 = sbr.rel (0) target = $region13
    $region12: #{oti_forward.1} parent=1 // pred_region
      _
    $region13: #{oti_forward.1} parent=1 // pred_fallthru
      _
    // Predicated region
    $region14: #{oti_forward.1} parent=1 // pred_check
      _
    $region15: #{oti_forward.1} parent=1 // pred_check_branch
      %38 = sbr.rel (0) target = $region17
    $region16: #{oti_forward.1} parent=1 // pred_region
      _
    $region17: #{oti_forward.1} parent=1 // pred_fallthru
      _
    // Predicated region
    $region18: #{oti_forward.1} parent=1 // pred_check
      _
    $region19: #{oti_forward.1} parent=1 // pred_check_branch
      %40 = sbr.rel (0) target = $region21
    $region20: #{oti_forward.1} parent=1 // pred_region
      %s42 = ssub.s32 16, 16
      %43 = vsyncadd [#allocation5], %s42
      %s45 = sshll.u32 [#allocation4], 4
      %s46 = int_to_ptr.vmem [resolvable:$true] %s45
      %48 = dma.hbm_to_vmem [thread:$0]  %s4, 16, %s46, [#allocation5]
    $region21: #{oti_forward.1} parent=1 // pred_fallthru
      _
    // Predicated region
    $region22: #{oti_forward.1} parent=1 // pred_check
      _
    $region23: #{oti_forward.1} parent=1 // pred_check_branch
      %50 = sbr.rel (0) target = $region25
    $region24: #{oti_forward.1} parent=1 // pred_region
      %s52 = ssub.s32 16, 16
      %53 = vsyncadd [#allocation7], %s52
      %s55 = sshll.u32 [#allocation6], 4
      %s56 = int_to_ptr.vmem [resolvable:$true] %s55
      %58 = dma.hbm_to_vmem [thread:$0]  %s5, 16, %s56, [#allocation7]
    $region25: #{oti_forward.1} parent=1 // pred_fallthru
      _
    // Predicated region
    $region26: #{oti_forward.1} parent=1 // pred_check
      _
    $region27: #{oti_forward.1} parent=1 // pred_check_branch
      %60 = sbr.rel (0) target = $region29
    $region28: #{oti_forward.1} parent=1 // pred_region
      %s62 = ssub.s32 3072, 3072
      %63 = vsyncadd [#allocation7], %s62
      %s64 = sshll.u32 [#allocation8], 4
      %s65 = int_to_ptr.vmem [resolvable:$true] %s64
      %70 = dma.hbm_to_vmem [thread:$0]  %s6, 3072, %s65, [#allocation7], 192, 192, 12
    $region29: #{oti_forward.1} parent=1 // pred_fallthru
      _
    // Predicated region
    $region30: #{oti_forward.1} parent=1 // pred_check
      _
    $region31: #{oti_forward.1} parent=1 // pred_check_branch
      %72 = sbr.rel (0) target = $region33
    $region32: #{oti_forward.1} parent=1 // pred_region
      _
    $region33: #{oti_forward.1} parent=1 // pred_fallthru
      _
    // Predicated region
    $region34: #{oti_forward.1} parent=1 // pred_check
      _
    $region35: #{oti_forward.1} parent=1 // pred_check_branch
      %74 = sbr.rel (0) target = $region37
    $region36: #{oti_forward.1} parent=1 // pred_region
      %s76 = ssub.s32 1024, 1024
      %77 = vsyncadd [#allocation10], %s76
      %s78 = sshll.u32 [#allocation9], 4
      %s79 = int_to_ptr.vmem [resolvable:$true] %s78
      %84 = dma.hbm_to_vmem [thread:$0]  %s8, 1024, %s79, [#allocation10], 64, 64, 4
    $region37: #{oti_forward.1} parent=1 // pred_fallthru
      _
    // Predicated region
    $region38: #{oti_forward.1} parent=1 // pred_check
      _
    $region39: #{oti_forward.1} parent=1 // pred_check_branch
      %86 = sbr.rel (0) target = $region41
    $region40: #{oti_forward.1} parent=1 // pred_region
      %s88 = ssub.s32 16, 16
      %89 = vsyncadd [#allocation10], %s88
      %s91 = sshll.u32 [#allocation11], 4
      %s92 = int_to_ptr.vmem [resolvable:$true] %s91
      %94 = dma.hbm_to_vmem [thread:$0]  %s9, 16, %s92, [#allocation10]
    $region41: #{oti_forward.1} parent=1 // pred_fallthru
      _
    // Predicated region
    $region42: #{oti_forward.1} parent=1 // pred_check
      _
    $region43: #{oti_forward.1} parent=1 // pred_check_branch
      %96 = sbr.rel (0) target = $region45
    $region44: #{oti_forward.1} parent=1 // pred_region
      %s98 = ssub.s32 16, 16
      %99 = vsyncadd [#allocation13], %s98
      %s101 = sshll.u32 [#allocation12], 4
      %s102 = int_to_ptr.vmem [resolvable:$true] %s101
      %104 = dma.hbm_to_vmem [thread:$0]  %s10, 16, %s102, [#allocation13]
    $region45: #{oti_forward.1} parent=1 // pred_fallthru
      _
    // Predicated region
    $region46: #{oti_forward.1} parent=1 // pred_check
      _
    $region47: #{oti_forward.1} parent=1 // pred_check_branch
      %106 = sbr.rel (0) target = $region49
    $region48: #{oti_forward.1} parent=1 // pred_region
      %s108 = ssub.s32 16, 16
      %109 = vsyncadd [#allocation13], %s108
      %s111 = sshll.u32 [#allocation14], 4
      %s112 = int_to_ptr.vmem [resolvable:$true] %s111
      %114 = dma.hbm_to_vmem [thread:$0]  %s11, 16, %s112, [#allocation13]
    $region49: #{oti_forward.1} parent=1 // pred_fallthru
      _
    // Predicated region
    $region50: #{oti_forward.1} parent=1 // pred_check
      _
    $region51: #{oti_forward.1} parent=1 // pred_check_branch
      %116 = sbr.rel (0) target = $region53
    $region52: #{oti_forward.1} parent=1 // pred_region
      _
    $region53: #{oti_forward.1} parent=1 // pred_fallthru
      _
    // Predicated region
    $region54: #{oti_forward.1} parent=1 // pred_check
      _
    $region55: #{oti_forward.1} parent=1 // pred_check_branch
      %118 = sbr.rel (0) target = $region57
    $region56: #{oti_forward.1} parent=1 // pred_region
      _
    $region57: #{oti_forward.1} parent=1 // pred_fallthru
      _
    // Predicated region
    $region58: #{oti_forward.1} parent=1 // pred_check
      _
    $region59: #{oti_forward.1} parent=1 // pred_check_branch
      %120 = sbr.rel (0) target = $region61
    $region60: #{oti_forward.1} parent=1 // pred_region
      _
    $region61: #{oti_forward.1} parent=1 // pred_fallthru
      _
    // Predicated region
    $region62: #{oti_forward.1} parent=1 // pred_check
      _
    $region63: #{oti_forward.1} parent=1 // pred_check_branch
      %122 = sbr.rel (0) target = $region65
    $region64: #{oti_forward.1} parent=1 // pred_region
      %s124 = ssub.s32 16, 16
      %125 = vsyncadd [#allocation16], %s124
      %s127 = sshll.u32 [#allocation15], 4
      %s128 = int_to_ptr.vmem [resolvable:$true] %s127
      %130 = dma.hbm_to_vmem [thread:$0]  %s15, 16, %s128, [#allocation16]
    $region65: #{oti_forward.1} parent=1 // pred_fallthru
      _
    // Predicated region
    $region66: #{oti_forward.1} parent=1 // pred_check
      _
    $region67: #{oti_forward.1} parent=1 // pred_check_branch
      %132 = sbr.rel (0) target = $region69
    $region68: #{oti_forward.1} parent=1 // pred_region
      _
    $region69: #{oti_forward.1} parent=1 // pred_fallthru
      _
    // Predicated region
    $region70: #{oti_forward.1} parent=1 // pred_check
      _
    $region71: #{oti_forward.1} parent=1 // pred_check_branch
      %134 = sbr.rel (0) target = $region73
    $region72: #{oti_forward.1} parent=1 // pred_region
      _
    $region73: #{oti_forward.1} parent=1 // pred_fallthru
      _
    // Predicated region
    $region74: #{oti_forward.1} parent=1 // pred_check
      _
    $region75: #{oti_forward.1} parent=1 // pred_check_branch
      %136 = sbr.rel (0) target = $region77
    $region76: #{oti_forward.1} parent=1 // pred_region
      %137 = dma.done [#allocation5], 16
    $region77: #{oti_forward.1} parent=1 // pred_fallthru
      _
    // Predicated region
    $region78: #{oti_forward.1} parent=1 // pred_check
      _
    $region79: #{oti_forward.1} parent=1 // pred_check_branch
      %139 = sbr.rel (0) target = $region81
    $region80: #{oti_forward.1} parent=1 // pred_region
      %140 = dma.done [#allocation7], 16
    $region81: #{oti_forward.1} parent=1 // pred_fallthru
      _
    // Predicated region
    $region82: #{oti_forward.1} parent=1 // pred_check
      _
    $region83: #{oti_forward.1} parent=1 // pred_check_branch
      %142 = sbr.rel (0) target = $region85
    $region84: #{oti_forward.1} parent=1 // pred_region
      %143 = dma.done [#allocation7], 3072
    $region85: #{oti_forward.1} parent=1 // pred_fallthru
      _
    // Predicated region
    $region86: #{oti_forward.1} parent=1 // pred_check
      _
    $region87: #{oti_forward.1} parent=1 // pred_check_branch
      %145 = sbr.rel (0) target = $region89
    $region88: #{oti_forward.1} parent=1 // pred_region
      %146 = dma.done [#allocation10], 1024
    $region89: #{oti_forward.1} parent=1 // pred_fallthru
      _
    // Predicated region
    $region90: #{oti_forward.1} parent=1 // pred_check
      _
    $region91: #{oti_forward.1} parent=1 // pred_check_branch
      %148 = sbr.rel (0) target = $region93
    $region92: #{oti_forward.1} parent=1 // pred_region
      %149 = dma.done [#allocation10], 16
    $region93: #{oti_forward.1} parent=1 // pred_fallthru
      _
    // Predicated region
    $region94: #{oti_forward.1} parent=1 // pred_check
      _
    $region95: #{oti_forward.1} parent=1 // pred_check_branch
      %151 = sbr.rel (0) target = $region97
    $region96: #{oti_forward.1} parent=1 // pred_region
      %152 = dma.done [#allocation13], 16
    $region97: #{oti_forward.1} parent=1 // pred_fallthru
      _
    // Predicated region
    $region98: #{oti_forward.1} parent=1 // pred_check
      _
    $region99: #{oti_forward.1} parent=1 // pred_check_branch
      %154 = sbr.rel (0) target = $region101
    $region100: #{oti_forward.1} parent=1 // pred_region
      %155 = dma.done [#allocation13], 16
    $region101: #{oti_forward.1} parent=1 // pred_fallthru
      _
    // Predicated region
    $region102: #{oti_forward.1} parent=1 // pred_check
      _
    $region103: #{oti_forward.1} parent=1 // pred_check_branch
      %157 = sbr.rel (0) target = $region105
    $region104: #{oti_forward.1} parent=1 // pred_region
      %158 = dma.done [#allocation16], 16
    $region105: #{oti_forward.1} parent=1 // pred_fallthru
      _
    %p160 = scmp.eq.s32.totalorder 0, 0
    // Predicated region
    $region106: #{oti_forward.1} parent=1 // pred_check
      %p161 = pneg %p160
    $region107: #{oti_forward.1} parent=1 // pred_check_branch
      %163 = sbr.rel (%p161) target = $region109
    $region108: #{oti_forward.1} parent=1 // pred_region
      %164 = vst [vmem:[#allocation2] sm:$0xff] 0.0
      %165 = vst [vmem:[#allocation2 + $0x8] sm:$0xff] 0.0
    $region109: #{oti_forward.1} parent=1 // pred_fallthru
      _
    %v166 = vld [vmem:[%s0] sm:$0xff]
    %v167 = vld [vmem:[%s0 + $0x8] sm:$0xff]
    %v168 = vld [vmem:[%s0 + $0x10] sm:$0xff]
    %v169 = vld [vmem:[%s0 + $0x18] sm:$0xff]
    %v170 = vld [vmem:[%s0 + $0x20] sm:$0xff]
    %v171 = vld [vmem:[%s0 + $0x28] sm:$0xff]
    %v172 = vld [vmem:[%s0 + $0x30] sm:$0xff]
    %v173 = vld [vmem:[%s0 + $0x38] sm:$0xff]
    %v174 = vld [vmem:[%s0 + $0x40] sm:$0xff]
    %v175 = vld [vmem:[%s0 + $0x48] sm:$0xff]
    %v176 = vld [vmem:[%s0 + $0x50] sm:$0xff]
    %v177 = vld [vmem:[%s0 + $0x58] sm:$0xff]
    %v178 = vpack.c.bf16 %v172, %v166
    %v179 = vpack.c.bf16 %v173, %v167
    %v180 = vpack.c.bf16 %v174, %v168
    %v181 = vpack.c.bf16 %v175, %v169
    %v182 = vpack.c.bf16 %v176, %v170
    %v183 = vpack.c.bf16 %v177, %v171
    %v184 = vld [vmem:[#allocation2] sm:$0xff]
    %v185 = vld [vmem:[#allocation2 + $0x8] sm:$0xff]
    %v186 = vld [vmem:[%s1] sm:$0xf]
    %v187 = vld [vmem:[%s1 + $0x4] sm:$0xf]
    %v188 = vld [vmem:[%s1 + $0x8] sm:$0xf]
    %v189 = vld [vmem:[%s1 + $0xc] sm:$0xf]
    %v190 = vld [vmem:[%s1 + $0x10] sm:$0xf]
    %v191 = vld [vmem:[%s1 + $0x14] sm:$0xf]
    %v192 = vld [vmem:[%s1 + $0x18] sm:$0xf]
    %v193 = vld [vmem:[%s1 + $0x1c] sm:$0xf]
    %v194 = vld [vmem:[%s1 + $0x20] sm:$0xf]
    %v195 = vld [vmem:[%s1 + $0x24] sm:$0xf]
    %v196 = vld [vmem:[%s1 + $0x28] sm:$0xf]
    %v197 = vld [vmem:[%s1 + $0x2c] sm:$0xf]
    %v198 = vld [vmem:[%s1 + $0x30] sm:$0xf]
    %v199 = vld [vmem:[%s1 + $0x34] sm:$0xf]
    %v200 = vld [vmem:[%s1 + $0x38] sm:$0xf]
    %v201 = vld [vmem:[%s1 + $0x3c] sm:$0xf]
    %v202 = vld [vmem:[%s1 + $0x40] sm:$0xf]
    %v203 = vld [vmem:[%s1 + $0x44] sm:$0xf]
    %v204 = vld [vmem:[%s1 + $0x48] sm:$0xf]
    %v205 = vld [vmem:[%s1 + $0x4c] sm:$0xf]
    %v206 = vld [vmem:[%s1 + $0x50] sm:$0xf]
    %v207 = vld [vmem:[%s1 + $0x54] sm:$0xf]
    %v208 = vld [vmem:[%s1 + $0x58] sm:$0xf]
    %v209 = vld [vmem:[%s1 + $0x5c] sm:$0xf]
    %v210 = vld [vmem:[%s1 + $0x60] sm:$0xf]
    %v211 = vld [vmem:[%s1 + $0x64] sm:$0xf]
    %v212 = vld [vmem:[%s1 + $0x68] sm:$0xf]
    %v213 = vld [vmem:[%s1 + $0x6c] sm:$0xf]
    %v214 = vld [vmem:[%s1 + $0x70] sm:$0xf]
    %v215 = vld [vmem:[%s1 + $0x74] sm:$0xf]
    %v216 = vld [vmem:[%s1 + $0x78] sm:$0xf]
    %v217 = vld [vmem:[%s1 + $0x7c] sm:$0xf]
    %v218 = vld [vmem:[%s1 + $0x80] sm:$0xf]
    %v219 = vld [vmem:[%s1 + $0x84] sm:$0xf]
    %v220 = vld [vmem:[%s1 + $0x88] sm:$0xf]
    %v221 = vld [vmem:[%s1 + $0x8c] sm:$0xf]
    %v222 = vld [vmem:[%s1 + $0x90] sm:$0xf]
    %v223 = vld [vmem:[%s1 + $0x94] sm:$0xf]
    %v224 = vld [vmem:[%s1 + $0x98] sm:$0xf]
    %v225 = vld [vmem:[%s1 + $0x9c] sm:$0xf]
    %v226 = vld [vmem:[%s1 + $0xa0] sm:$0xf]
    %v227 = vld [vmem:[%s1 + $0xa4] sm:$0xf]
    %v228 = vld [vmem:[%s1 + $0xa8] sm:$0xf]
    %v229 = vld [vmem:[%s1 + $0xac] sm:$0xf]
    %v230 = vld [vmem:[%s1 + $0xb0] sm:$0xf]
    %v231 = vld [vmem:[%s1 + $0xb4] sm:$0xf]
    %v232 = vld [vmem:[%s1 + $0xb8] sm:$0xf]
    %v233 = vld [vmem:[%s1 + $0xbc] sm:$0xf]
    %v234 = vld [vmem:[%s1 + $0xc0] sm:$0xf]
    %v235 = vld [vmem:[%s1 + $0xc4] sm:$0xf]
    %v236 = vld [vmem:[%s1 + $0xc8] sm:$0xf]
    %v237 = vld [vmem:[%s1 + $0xcc] sm:$0xf]
    %v238 = vld [vmem:[%s1 + $0xd0] sm:$0xf]
    %v239 = vld [vmem:[%s1 + $0xd4] sm:$0xf]
    %v240 = vld [vmem:[%s1 + $0xd8] sm:$0xf]
    %v241 = vld [vmem:[%s1 + $0xdc] sm:$0xf]
    %v242 = vld [vmem:[%s1 + $0xe0] sm:$0xf]
    %v243 = vld [vmem:[%s1 + $0xe4] sm:$0xf]
    %v244 = vld [vmem:[%s1 + $0xe8] sm:$0xf]
    %v245 = vld [vmem:[%s1 + $0xec] sm:$0xf]
    %v246 = vld [vmem:[%s1 + $0xf0] sm:$0xf]
    %v247 = vld [vmem:[%s1 + $0xf4] sm:$0xf]
    %v248 = vld [vmem:[%s1 + $0xf8] sm:$0xf]
    %v249 = vld [vmem:[%s1 + $0xfc] sm:$0xf]
    %v250 = vld [vmem:[%s1 + $0x100] sm:$0xf]
    %v251 = vld [vmem:[%s1 + $0x104] sm:$0xf]
    %v252 = vld [vmem:[%s1 + $0x108] sm:$0xf]
    %v253 = vld [vmem:[%s1 + $0x10c] sm:$0xf]
    %v254 = vld [vmem:[%s1 + $0x110] sm:$0xf]
    %v255 = vld [vmem:[%s1 + $0x114] sm:$0xf]
    %v256 = vld [vmem:[%s1 + $0x118] sm:$0xf]
    %v257 = vld [vmem:[%s1 + $0x11c] sm:$0xf]
    %v258 = vld [vmem:[%s1 + $0x120] sm:$0xf]
    %v259 = vld [vmem:[%s1 + $0x124] sm:$0xf]
    %v260 = vld [vmem:[%s1 + $0x128] sm:$0xf]
    %v261 = vld [vmem:[%s1 + $0x12c] sm:$0xf]
    %v262 = vld [vmem:[%s1 + $0x130] sm:$0xf]
    %v263 = vld [vmem:[%s1 + $0x134] sm:$0xf]
    %v264 = vld [vmem:[%s1 + $0x138] sm:$0xf]
    %v265 = vld [vmem:[%s1 + $0x13c] sm:$0xf]
    %v266 = vld [vmem:[%s1 + $0x140] sm:$0xf]
    %v267 = vld [vmem:[%s1 + $0x144] sm:$0xf]
    %v268 = vld [vmem:[%s1 + $0x148] sm:$0xf]
    %v269 = vld [vmem:[%s1 + $0x14c] sm:$0xf]
    %v270 = vld [vmem:[%s1 + $0x150] sm:$0xf]
    %v271 = vld [vmem:[%s1 + $0x154] sm:$0xf]
    %v272 = vld [vmem:[%s1 + $0x158] sm:$0xf]
    %v273 = vld [vmem:[%s1 + $0x15c] sm:$0xf]
    %v274 = vld [vmem:[%s1 + $0x160] sm:$0xf]
    %v275 = vld [vmem:[%s1 + $0x164] sm:$0xf]
    %v276 = vld [vmem:[%s1 + $0x168] sm:$0xf]
    %v277 = vld [vmem:[%s1 + $0x16c] sm:$0xf]
    %v278 = vld [vmem:[%s1 + $0x170] sm:$0xf]
    %v279 = vld [vmem:[%s1 + $0x174] sm:$0xf]
    %v280 = vld [vmem:[%s1 + $0x178] sm:$0xf]
    %v281 = vld [vmem:[%s1 + $0x17c] sm:$0xf]
    %v378 = vunpack.c.l.b16 %v186
    %v379 = vunpack.c.l.b16 %v187
    %v380 = vunpack.c.l.b16 %v188
    %v381 = vunpack.c.l.b16 %v189
    %v382 = vunpack.c.l.b16 %v190
    %v383 = vunpack.c.l.b16 %v191
    %v384 = vunpack.c.l.b16 %v192
    %v385 = vunpack.c.l.b16 %v193
    %v386 = vunpack.c.l.b16 %v194
    %v387 = vunpack.c.l.b16 %v195
    %v388 = vunpack.c.l.b16 %v196
    %v389 = vunpack.c.l.b16 %v197
    %v390 = vunpack.c.l.b16 %v198
    %v391 = vunpack.c.l.b16 %v199
    %v392 = vunpack.c.l.b16 %v200
    %v393 = vunpack.c.l.b16 %v201
    %v394 = vunpack.c.l.b16 %v202
    %v395 = vunpack.c.l.b16 %v203
    %v396 = vunpack.c.l.b16 %v204
    %v397 = vunpack.c.l.b16 %v205
    %v398 = vunpack.c.l.b16 %v206
    %v399 = vunpack.c.l.b16 %v207
    %v400 = vunpack.c.l.b16 %v208
    %v401 = vunpack.c.l.b16 %v209
    %v402 = vunpack.c.l.b16 %v210
    %v403 = vunpack.c.l.b16 %v211
    %v404 = vunpack.c.l.b16 %v212
    %v405 = vunpack.c.l.b16 %v213
    %v406 = vunpack.c.l.b16 %v214
    %v407 = vunpack.c.l.b16 %v215
    %v408 = vunpack.c.l.b16 %v216
    %v409 = vunpack.c.l.b16 %v217
    %v410 = vunpack.c.l.b16 %v218
    %v411 = vunpack.c.l.b16 %v219
    %v412 = vunpack.c.l.b16 %v220
    %v413 = vunpack.c.l.b16 %v221
    %v414 = vunpack.c.l.b16 %v222
    %v415 = vunpack.c.l.b16 %v223
    %v416 = vunpack.c.l.b16 %v224
    %v417 = vunpack.c.l.b16 %v225
    %v418 = vunpack.c.l.b16 %v226
    %v419 = vunpack.c.l.b16 %v227
    %v420 = vunpack.c.l.b16 %v228
    %v421 = vunpack.c.l.b16 %v229
    %v422 = vunpack.c.l.b16 %v230
    %v423 = vunpack.c.l.b16 %v231
    %v424 = vunpack.c.l.b16 %v232
    %v425 = vunpack.c.l.b16 %v233
    %v426 = vunpack.c.l.b16 %v234
    %v427 = vunpack.c.l.b16 %v235
    %v428 = vunpack.c.l.b16 %v236
    %v429 = vunpack.c.l.b16 %v237
    %v430 = vunpack.c.l.b16 %v238
    %v431 = vunpack.c.l.b16 %v239
    %v432 = vunpack.c.l.b16 %v240
    %v433 = vunpack.c.l.b16 %v241
    %v434 = vunpack.c.l.b16 %v242
    %v435 = vunpack.c.l.b16 %v243
    %v436 = vunpack.c.l.b16 %v244
    %v437 = vunpack.c.l.b16 %v245
    %v438 = vunpack.c.l.b16 %v246
    %v439 = vunpack.c.l.b16 %v247
    %v440 = vunpack.c.l.b16 %v248
    %v441 = vunpack.c.l.b16 %v249
    %v442 = vunpack.c.l.b16 %v250
    %v443 = vunpack.c.l.b16 %v251
    %v444 = vunpack.c.l.b16 %v252
    %v445 = vunpack.c.l.b16 %v253
    %v446 = vunpack.c.l.b16 %v254
    %v447 = vunpack.c.l.b16 %v255
    %v448 = vunpack.c.l.b16 %v256
    %v449 = vunpack.c.l.b16 %v257
    %v450 = vunpack.c.l.b16 %v258
    %v451 = vunpack.c.l.b16 %v259
    %v452 = vunpack.c.l.b16 %v260
    %v453 = vunpack.c.l.b16 %v261
    %v454 = vunpack.c.l.b16 %v262
    %v455 = vunpack.c.l.b16 %v263
    %v456 = vunpack.c.l.b16 %v264
    %v457 = vunpack.c.l.b16 %v265
    %v458 = vunpack.c.l.b16 %v266
    %v459 = vunpack.c.l.b16 %v267
    %v460 = vunpack.c.l.b16 %v268
    %v461 = vunpack.c.l.b16 %v269
    %v462 = vunpack.c.l.b16 %v270
    %v463 = vunpack.c.l.b16 %v271
    %v464 = vunpack.c.l.b16 %v272
    %v465 = vunpack.c.l.b16 %v273
    %v466 = vunpack.c.l.b16 %v274
    %v467 = vunpack.c.l.b16 %v275
    %v468 = vunpack.c.l.b16 %v276
    %v469 = vunpack.c.l.b16 %v277
    %v470 = vunpack.c.l.b16 %v278
    %v471 = vunpack.c.l.b16 %v279
    %v472 = vunpack.c.l.b16 %v280
    %v473 = vunpack.c.l.b16 %v281
    %v474 = vpack.c.b16 %v379, %v378
    %v475 = vpack.c.b16 %v381, %v380
    %v476 = vpack.c.b16 %v383, %v382
    %v477 = vpack.c.b16 %v385, %v384
    %v478 = vpack.c.b16 %v387, %v386
    %v479 = vpack.c.b16 %v389, %v388
    %v480 = vpack.c.b16 %v391, %v390
    %v481 = vpack.c.b16 %v393, %v392
    %v482 = vpack.c.b16 %v395, %v394
    %v483 = vpack.c.b16 %v397, %v396
    %v484 = vpack.c.b16 %v399, %v398
    %v485 = vpack.c.b16 %v401, %v400
    %v486 = vpack.c.b16 %v403, %v402
    %v487 = vpack.c.b16 %v405, %v404
    %v488 = vpack.c.b16 %v407, %v406
    %v489 = vpack.c.b16 %v409, %v408
    %v490 = vpack.c.b16 %v411, %v410
    %v491 = vpack.c.b16 %v413, %v412
    %v492 = vpack.c.b16 %v415, %v414
    %v493 = vpack.c.b16 %v417, %v416
    %v494 = vpack.c.b16 %v419, %v418
    %v495 = vpack.c.b16 %v421, %v420
    %v496 = vpack.c.b16 %v423, %v422
    %v497 = vpack.c.b16 %v425, %v424
    %v498 = vpack.c.b16 %v427, %v426
    %v499 = vpack.c.b16 %v429, %v428
    %v500 = vpack.c.b16 %v431, %v430
    %v501 = vpack.c.b16 %v433, %v432
    %v502 = vpack.c.b16 %v435, %v434
    %v503 = vpack.c.b16 %v437, %v436
    %v504 = vpack.c.b16 %v439, %v438
    %v505 = vpack.c.b16 %v441, %v440
    %v506 = vpack.c.b16 %v443, %v442
    %v507 = vpack.c.b16 %v445, %v444
    %v508 = vpack.c.b16 %v447, %v446
    %v509 = vpack.c.b16 %v449, %v448
    %v510 = vpack.c.b16 %v451, %v450
    %v511 = vpack.c.b16 %v453, %v452
    %v512 = vpack.c.b16 %v455, %v454
    %v513 = vpack.c.b16 %v457, %v456
    %v514 = vpack.c.b16 %v459, %v458
    %v515 = vpack.c.b16 %v461, %v460
    %v516 = vpack.c.b16 %v463, %v462
    %v517 = vpack.c.b16 %v465, %v464
    %v518 = vpack.c.b16 %v467, %v466
    %v519 = vpack.c.b16 %v469, %v468
    %v520 = vpack.c.b16 %v471, %v470
    %v521 = vpack.c.b16 %v473, %v472
    %570 = vmatprep.subr.bf16.mxu0 0
    %571 = vmatpush1.bf16.msra.mxu0 %v481
    %572 = vmatprep.subr.bf16.mxu0 0
    %573 = vmatpush1.bf16.msra.mxu0 %v480
    %574 = vmatprep.subr.bf16.mxu0 0
    %575 = vmatpush1.bf16.msra.mxu0 %v479
    %576 = vmatprep.subr.bf16.mxu0 0
    %577 = vmatpush1.bf16.msra.mxu0 %v478
    %578 = vmatprep.subr.bf16.mxu0 0
    %579 = vmatpush1.bf16.msra.mxu0 %v477
    %580 = vmatprep.subr.bf16.mxu0 0
    %581 = vmatpush1.bf16.msra.mxu0 %v476
    %582 = vmatprep.subr.bf16.mxu0 0
    %583 = vmatpush1.bf16.msra.mxu0 %v475
    %584 = vmatprep.subr.bf16.mxu0 0
    %585 = vmatpush1.bf16.msra.mxu0 %v474
    %586 = vmatprep.subr.bf16.mxu0 0
    %587 = vmatpush2.bf16.msra.mxu0 %v489
    %588 = vmatprep.subr.bf16.mxu0 0
    %589 = vmatpush2.bf16.msra.mxu0 %v488
    %590 = vmatprep.subr.bf16.mxu0 0
    %591 = vmatpush2.bf16.msra.mxu0 %v487
    %592 = vmatprep.subr.bf16.mxu0 0
    %593 = vmatpush2.bf16.msra.mxu0 %v486
    %594 = vmatprep.subr.bf16.mxu0 0
    %595 = vmatpush2.bf16.msra.mxu0 %v485
    %596 = vmatprep.subr.bf16.mxu0 0
    %597 = vmatpush2.bf16.msra.mxu0 %v484
    %598 = vmatprep.subr.bf16.mxu0 0
    %599 = vmatpush2.bf16.msra.mxu0 %v483
    %600 = vmatprep.subr.bf16.mxu0 0
    %601 = vmatpush2.bf16.msra.mxu0 %v482
    %602 = vmatprep.mubr.bf16.mxu0 %v179
    %603 = vmatmul.mubr.bf16.gmra.mxu0 %v178
    %v604 = vpop.f32.mrf.mxu0
    %v605 = vadd.f32 0.0, %v604
    %v606 = vpop.f32.mrf.mxu0
    %v607 = vpop.f32.mrf.mxu0
    %v608 = vadd.f32 0.0, %v607
    %v609 = vpop.f32.mrf.mxu0
    %610 = vdwg.mxu0
    %611 = vmatprep.subr.bf16.mxu0 0
    %612 = vmatpush1.bf16.msra.mxu0 %v497
    %613 = vmatprep.subr.bf16.mxu0 0
    %614 = vmatpush1.bf16.msra.mxu0 %v496
    %615 = vmatprep.subr.bf16.mxu0 0
    %616 = vmatpush1.bf16.msra.mxu0 %v495
    %617 = vmatprep.subr.bf16.mxu0 0
    %618 = vmatpush1.bf16.msra.mxu0 %v494
    %619 = vmatprep.subr.bf16.mxu0 0
    %620 = vmatpush1.bf16.msra.mxu0 %v493
    %621 = vmatprep.subr.bf16.mxu0 0
    %622 = vmatpush1.bf16.msra.mxu0 %v492
    %623 = vmatprep.subr.bf16.mxu0 0
    %624 = vmatpush1.bf16.msra.mxu0 %v491
    %625 = vmatprep.subr.bf16.mxu0 0
    %626 = vmatpush1.bf16.msra.mxu0 %v490
    %627 = vmatprep.subr.bf16.mxu0 0
    %628 = vmatpush2.bf16.msra.mxu0 %v505
    %629 = vmatprep.subr.bf16.mxu0 0
    %630 = vmatpush2.bf16.msra.mxu0 %v504
    %631 = vmatprep.subr.bf16.mxu0 0
    %632 = vmatpush2.bf16.msra.mxu0 %v503
    %633 = vmatprep.subr.bf16.mxu0 0
    %634 = vmatpush2.bf16.msra.mxu0 %v502
    %635 = vmatprep.subr.bf16.mxu0 0
    %636 = vmatpush2.bf16.msra.mxu0 %v501
    %637 = vmatprep.subr.bf16.mxu0 0
    %638 = vmatpush2.bf16.msra.mxu0 %v500
    %639 = vmatprep.subr.bf16.mxu0 0
    %640 = vmatpush2.bf16.msra.mxu0 %v499
    %641 = vmatprep.subr.bf16.mxu0 0
    %642 = vmatpush2.bf16.msra.mxu0 %v498
    %643 = vmatprep.mubr.bf16.mxu0 %v181
    %644 = vmatmul.mubr.bf16.gmra.mxu0 %v180
    %v645 = vpop.f32.mrf.mxu0
    %v646 = vadd.f32 %v605, %v645
    %v647 = vpop.f32.mrf.mxu0
    %v648 = vpop.f32.mrf.mxu0
    %v649 = vadd.f32 %v608, %v648
    %v650 = vpop.f32.mrf.mxu0
    %651 = vdwg.mxu0
    %652 = vmatprep.subr.bf16.mxu0 0
    %653 = vmatpush1.bf16.msra.mxu0 %v513
    %654 = vmatprep.subr.bf16.mxu0 0
    %655 = vmatpush1.bf16.msra.mxu0 %v512
    %656 = vmatprep.subr.bf16.mxu0 0
    %657 = vmatpush1.bf16.msra.mxu0 %v511
    %658 = vmatprep.subr.bf16.mxu0 0
    %659 = vmatpush1.bf16.msra.mxu0 %v510
    %660 = vmatprep.subr.bf16.mxu0 0
    %661 = vmatpush1.bf16.msra.mxu0 %v509
    %662 = vmatprep.subr.bf16.mxu0 0
    %663 = vmatpush1.bf16.msra.mxu0 %v508
    %664 = vmatprep.subr.bf16.mxu0 0
    %665 = vmatpush1.bf16.msra.mxu0 %v507
    %666 = vmatprep.subr.bf16.mxu0 0
    %667 = vmatpush1.bf16.msra.mxu0 %v506
    %668 = vmatprep.subr.bf16.mxu0 0
    %669 = vmatpush2.bf16.msra.mxu0 %v521
    %670 = vmatprep.subr.bf16.mxu0 0
    %671 = vmatpush2.bf16.msra.mxu0 %v520
    %672 = vmatprep.subr.bf16.mxu0 0
    %673 = vmatpush2.bf16.msra.mxu0 %v519
    %674 = vmatprep.subr.bf16.mxu0 0
    %675 = vmatpush2.bf16.msra.mxu0 %v518
    %676 = vmatprep.subr.bf16.mxu0 0
    %677 = vmatpush2.bf16.msra.mxu0 %v517
    %678 = vmatprep.subr.bf16.mxu0 0
    %679 = vmatpush2.bf16.msra.mxu0 %v516
    %680 = vmatprep.subr.bf16.mxu0 0
    %681 = vmatpush2.bf16.msra.mxu0 %v515
    %682 = vmatprep.subr.bf16.mxu0 0
    %683 = vmatpush2.bf16.msra.mxu0 %v514
    %684 = vmatprep.mubr.bf16.mxu0 %v183
    %685 = vmatmul.mubr.bf16.gmra.mxu0 %v182
    %v686 = vpop.f32.mrf.mxu0
    %v687 = vadd.f32 %v646, %v686
    %v688 = vpop.f32.mrf.mxu0
    %v689 = vpop.f32.mrf.mxu0
    %v690 = vadd.f32 %v649, %v689
    %v691 = vpop.f32.mrf.mxu0
    %692 = vdwg.mxu0
    %v693 = vadd.f32 %v184, %v687
    %v694 = vadd.f32 %v185, %v690
    %695 = vst [vmem:[#allocation2] sm:$0xff] %v693
    %696 = vst [vmem:[#allocation2 + $0x8] sm:$0xff] %v694
    // Predicated region
    $region110: #{oti_forward.1} parent=1 // pred_check
      %p697 = pneg %p160
    $region111: #{oti_forward.1} parent=1 // pred_check_branch
      %699 = sbr.rel (%p697) target = $region113
    $region112: #{oti_forward.1} parent=1 // pred_region
      %v700 = vld [vmem:[#allocation2] sm:$0xff]
      %v701 = vld [vmem:[#allocation2 + $0x8] sm:$0xff]
      %v702 = vld [vmem:[%s2] sm:$0x1]
      %v704 = vlaneseq
      %v705 = vshrl.u32 %v704, 7
      %v706 = vsub.s32 0, %v705
      %v707 = vrot.slane %v702, %v706
      %v709 = vadd.f32 %v700, %v707
      %v710 = vadd.f32 %v701, %v707
      %v711 = vrot.slane %v709, 4
      %v712 = vadd.f32 %v709, %v711
      %v713 = vrot.slane %v712, 2
      %v714 = vadd.f32 %v712, %v713
      %v715 = vrot.slane %v714, 1
      %v716 = vadd.f32 %v714, %v715
      %v717 = vrot.slane %v710, 4
      %v718 = vadd.f32 %v710, %v717
      %v719 = vrot.slane %v718, 2
      %v720 = vadd.f32 %v718, %v719
      %v721 = vrot.slane %v720, 1
      %v722 = vadd.f32 %v720, %v721
      %v723 = vrcp.pop 8.0
      %v724 = vmul.f32 %v716, %v723
      %v725 = vmul.f32 %v722, %v723
      %v726 = vld [vmem:[%s3] sm:$0xff]
      %v727 = vadd.f32 %v709, %v726
      %v728 = vadd.f32 %v710, %v726
      %v729 = vld [vmem:[#allocation4] sm:$0x1]
      %v730 = vld [vmem:[#allocation6] sm:$0x1]
      %731 = vadd.xlane.f32.xlu0 %v727
      %v732 = vpop.xlane.xlu0 %731
      %733 = vadd.xlane.f32.xlu0 %v728
      %v734 = vpop.xlane.xlu0 %733
      %v735 = vrcp.pop 128.0
      %v736 = vmul.f32 %v732, %v735
      %v737 = vmul.f32 %v734, %v735
      %v738 = vsub.f32 %v727, %v736
      %v739 = vsub.f32 %v728, %v737
      %v740 = vmul.f32 %v738, %v738
      %v741 = vmul.f32 %v739, %v739
      %742 = vadd.xlane.f32.xlu0 %v740
      %v743 = vpop.xlane.xlu0 %742
      %744 = vadd.xlane.f32.xlu0 %v741
      %v745 = vpop.xlane.xlu0 %744
      %v746 = vmul.f32 %v743, %v735
      %v747 = vmul.f32 %v745, %v735
      %v748 = vadd.f32 %v746, 1e-12
      %v749 = vadd.f32 %v747, 1e-12
      %v750 = vrsqrt.pop %v748
      %v751 = vrsqrt.pop %v749
      %v752 = vmul.f32 %v738, %v750
      %v753 = vmul.f32 %v739, %v751
      %v755 = vlaneseq
      %v756 = vshrl.u32 %v755, 7
      %v757 = vsub.s32 0, %v756
      %v758 = vrot.slane %v729, %v757
      %v760 = vmul.f32 %v758, %v752
      %v761 = vmul.f32 %v758, %v753
      %v763 = vlaneseq
      %v764 = vshrl.u32 %v763, 7
      %v765 = vsub.s32 0, %v764
      %v766 = vrot.slane %v730, %v765
      %v768 = vadd.f32 %v760, %v766
      %v769 = vadd.f32 %v761, %v766
      %v770 = vpack.c.bf16 %v769, %v768
      %v771 = vld [vmem:[#allocation8] sm:$0xff]
      %v772 = vld [vmem:[#allocation8 + $0x8] sm:$0xf]
      %v773 = vld [vmem:[#allocation8 + $0xc] sm:$0xff]
      %v774 = vld [vmem:[#allocation8 + $0x14] sm:$0xf]
      %v775 = vld [vmem:[#allocation8 + $0x18] sm:$0xff]
      %v776 = vld [vmem:[#allocation8 + $0x20] sm:$0xf]
      %v777 = vld [vmem:[#allocation8 + $0x24] sm:$0xff]
      %v778 = vld [vmem:[#allocation8 + $0x2c] sm:$0xf]
      %v779 = vld [vmem:[#allocation8 + $0x30] sm:$0xff]
      %v780 = vld [vmem:[#allocation8 + $0x38] sm:$0xf]
      %v781 = vld [vmem:[#allocation8 + $0x3c] sm:$0xff]
      %v782 = vld [vmem:[#allocation8 + $0x44] sm:$0xf]
      %v783 = vld [vmem:[#allocation8 + $0x48] sm:$0xff]
      %v784 = vld [vmem:[#allocation8 + $0x50] sm:$0xf]
      %v785 = vld [vmem:[#allocation8 + $0x54] sm:$0xff]
      %v786 = vld [vmem:[#allocation8 + $0x5c] sm:$0xf]
      %v787 = vld [vmem:[#allocation8 + $0x60] sm:$0xff]
      %v788 = vld [vmem:[#allocation8 + $0x68] sm:$0xf]
      %v789 = vld [vmem:[#allocation8 + $0x6c] sm:$0xff]
      %v790 = vld [vmem:[#allocation8 + $0x74] sm:$0xf]
      %v791 = vld [vmem:[#allocation8 + $0x78] sm:$0xff]
      %v792 = vld [vmem:[#allocation8 + $0x80] sm:$0xf]
      %v793 = vld [vmem:[#allocation8 + $0x84] sm:$0xff]
      %v794 = vld [vmem:[#allocation8 + $0x8c] sm:$0xf]
      %v795 = vld [vmem:[#allocation8 + $0x90] sm:$0xff]
      %v796 = vld [vmem:[#allocation8 + $0x98] sm:$0xf]
      %v797 = vld [vmem:[#allocation8 + $0x9c] sm:$0xff]
      %v798 = vld [vmem:[#allocation8 + $0xa4] sm:$0xf]
      %v799 = vld [vmem:[#allocation8 + $0xa8] sm:$0xff]
      %v800 = vld [vmem:[#allocation8 + $0xb0] sm:$0xf]
      %v801 = vld [vmem:[#allocation8 + $0xb4] sm:$0xff]
      %v802 = vld [vmem:[#allocation8 + $0xbc] sm:$0xf]
      %v803 = vld [vmem:[%s7] sm:$0x7]
      %v805 = vlaneseq
      %v806 = vshrl.u32 %v805, 7
      %v807 = vsub.s32 0, %v806
      %v808 = vrot.slane %v803, %v807
      %v809 = vlaneseq
      %v810 = vshrl.u32 %v809, 7
      %v811 = vsub.s32 1, %v810
      %v812 = vrot.slane %v803, %v811
      %v813 = vlaneseq
      %v814 = vshrl.u32 %v813, 7
      %v815 = vsub.s32 2, %v814
      %v816 = vrot.slane %v803, %v815
      %v852 = vunpack.c.l.b16 %v771
      %v853 = vunpack.c.h.b16 %v771
      %v854 = vunpack.c.l.b16 %v772
      %v855 = vunpack.c.l.b16 %v773
      %v856 = vunpack.c.h.b16 %v773
      %v857 = vunpack.c.l.b16 %v774
      %v858 = vunpack.c.l.b16 %v775
      %v859 = vunpack.c.h.b16 %v775
      %v860 = vunpack.c.l.b16 %v776
      %v861 = vunpack.c.l.b16 %v777
      %v862 = vunpack.c.h.b16 %v777
      %v863 = vunpack.c.l.b16 %v778
      %v864 = vunpack.c.l.b16 %v779
      %v865 = vunpack.c.h.b16 %v779
      %v866 = vunpack.c.l.b16 %v780
      %v867 = vunpack.c.l.b16 %v781
      %v868 = vunpack.c.h.b16 %v781
      %v869 = vunpack.c.l.b16 %v782
      %v870 = vunpack.c.l.b16 %v783
      %v871 = vunpack.c.h.b16 %v783
      %v872 = vunpack.c.l.b16 %v784
      %v873 = vunpack.c.l.b16 %v785
      %v874 = vunpack.c.h.b16 %v785
      %v875 = vunpack.c.l.b16 %v786
      %v876 = vunpack.c.l.b16 %v787
      %v877 = vunpack.c.h.b16 %v787
      %v878 = vunpack.c.l.b16 %v788
      %v879 = vunpack.c.l.b16 %v789
      %v880 = vunpack.c.h.b16 %v789
      %v881 = vunpack.c.l.b16 %v790
      %v882 = vunpack.c.l.b16 %v791
      %v883 = vunpack.c.h.b16 %v791
      %v884 = vunpack.c.l.b16 %v792
      %v885 = vunpack.c.l.b16 %v793
      %v886 = vunpack.c.h.b16 %v793
      %v887 = vunpack.c.l.b16 %v794
      %v888 = vunpack.c.l.b16 %v795
      %v889 = vunpack.c.h.b16 %v795
      %v890 = vunpack.c.l.b16 %v796
      %v891 = vunpack.c.l.b16 %v797
      %v892 = vunpack.c.h.b16 %v797
      %v893 = vunpack.c.l.b16 %v798
      %v894 = vunpack.c.l.b16 %v799
      %v895 = vunpack.c.h.b16 %v799
      %v896 = vunpack.c.l.b16 %v800
      %v897 = vunpack.c.l.b16 %v801
      %v898 = vunpack.c.h.b16 %v801
      %v899 = vunpack.c.l.b16 %v802
      %v900 = vpack.c.b16 %v855, %v852
      %v901 = vpack.c.b16 %v856, %v853
      %v902 = vpack.c.b16 %v857, %v854
      %v903 = vpack.c.b16 %v861, %v858
      %v904 = vpack.c.b16 %v862, %v859
      %v905 = vpack.c.b16 %v863, %v860
      %v906 = vpack.c.b16 %v867, %v864
      %v907 = vpack.c.b16 %v868, %v865
      %v908 = vpack.c.b16 %v869, %v866
      %v909 = vpack.c.b16 %v873, %v870
      %v910 = vpack.c.b16 %v874, %v871
      %v911 = vpack.c.b16 %v875, %v872
      %v912 = vpack.c.b16 %v879, %v876
      %v913 = vpack.c.b16 %v880, %v877
      %v914 = vpack.c.b16 %v881, %v878
      %v915 = vpack.c.b16 %v885, %v882
      %v916 = vpack.c.b16 %v886, %v883
      %v917 = vpack.c.b16 %v887, %v884
      %v918 = vpack.c.b16 %v891, %v888
      %v919 = vpack.c.b16 %v892, %v889
      %v920 = vpack.c.b16 %v893, %v890
      %v921 = vpack.c.b16 %v897, %v894
      %v922 = vpack.c.b16 %v898, %v895
      %v923 = vpack.c.b16 %v899, %v896
      %948 = vmatprep.subr.bf16.mxu0 %v922
      %949 = vmatpush1.bf16.msra.mxu0 %v921
      %950 = vmatprep.subr.bf16.mxu0 %v919
      %951 = vmatpush1.bf16.msra.mxu0 %v918
      %952 = vmatprep.subr.bf16.mxu0 %v916
      %953 = vmatpush1.bf16.msra.mxu0 %v915
      %954 = vmatprep.subr.bf16.mxu0 %v913
      %955 = vmatpush1.bf16.msra.mxu0 %v912
      %956 = vmatprep.subr.bf16.mxu0 %v910
      %957 = vmatpush1.bf16.msra.mxu0 %v909
      %958 = vmatprep.subr.bf16.mxu0 %v907
      %959 = vmatpush1.bf16.msra.mxu0 %v906
      %960 = vmatprep.subr.bf16.mxu0 %v904
      %961 = vmatpush1.bf16.msra.mxu0 %v903
      %962 = vmatprep.subr.bf16.mxu0 %v901
      %963 = vmatpush1.bf16.msra.mxu0 %v900
      %964 = vmatprep.subr.bf16.mxu0 0
      %965 = vmatpush2.bf16.msra.mxu0 0
      %966 = vmatprep.subr.bf16.mxu0 0
      %967 = vmatpush2.bf16.msra.mxu0 0
      %968 = vmatprep.subr.bf16.mxu0 0
      %969 = vmatpush2.bf16.msra.mxu0 0
      %970 = vmatprep.subr.bf16.mxu0 0
      %971 = vmatpush2.bf16.msra.mxu0 0
      %972 = vmatprep.subr.bf16.mxu0 0
      %973 = vmatpush2.bf16.msra.mxu0 0
      %974 = vmatprep.subr.bf16.mxu0 0
      %975 = vmatpush2.bf16.msra.mxu0 0
      %976 = vmatprep.subr.bf16.mxu0 0
      %977 = vmatpush2.bf16.msra.mxu0 0
      %978 = vmatprep.subr.bf16.mxu0 0
      %979 = vmatpush2.bf16.msra.mxu0 0
      %980 = vmatprep.mubr.bf16.mxu0 0
      %981 = vmatmul.mubr.bf16.gmra.mxu0 %v770
      %v982 = vpop.f32.mrf.mxu0
      %v983 = vadd.f32 %v808, %v982
      %v984 = vpop.f32.mrf.mxu0
      %v985 = vadd.f32 %v812, %v984
      %v986 = vpop.f32.mrf.mxu0
      %v987 = vadd.f32 %v808, %v986
      %v988 = vpop.f32.mrf.mxu0
      %v989 = vadd.f32 %v812, %v988
      %990 = vdwg.mxu0
      %991 = vmatprep.subr.bf16.mxu0 0
      %992 = vmatpush1.bf16.msra.mxu0 %v923
      %993 = vmatprep.subr.bf16.mxu0 0
      %994 = vmatpush1.bf16.msra.mxu0 %v920
      %995 = vmatprep.subr.bf16.mxu0 0
      %996 = vmatpush1.bf16.msra.mxu0 %v917
      %997 = vmatprep.subr.bf16.mxu0 0
      %998 = vmatpush1.bf16.msra.mxu0 %v914
      %999 = vmatprep.subr.bf16.mxu0 0
      %1000 = vmatpush1.bf16.msra.mxu0 %v911
      %1001 = vmatprep.subr.bf16.mxu0 0
      %1002 = vmatpush1.bf16.msra.mxu0 %v908
      %1003 = vmatprep.subr.bf16.mxu0 0
      %1004 = vmatpush1.bf16.msra.mxu0 %v905
      %1005 = vmatprep.subr.bf16.mxu0 0
      %1006 = vmatpush1.bf16.msra.mxu0 %v902
      %1007 = vmatprep.subr.bf16.mxu0 0
      %1008 = vmatpush2.bf16.msra.mxu0 0
      %1009 = vmatprep.subr.bf16.mxu0 0
      %1010 = vmatpush2.bf16.msra.mxu0 0
      %1011 = vmatprep.subr.bf16.mxu0 0
      %1012 = vmatpush2.bf16.msra.mxu0 0
      %1013 = vmatprep.subr.bf16.mxu0 0
      %1014 = vmatpush2.bf16.msra.mxu0 0
      %1015 = vmatprep.subr.bf16.mxu0 0
      %1016 = vmatpush2.bf16.msra.mxu0 0
      %1017 = vmatprep.subr.bf16.mxu0 0
      %1018 = vmatpush2.bf16.msra.mxu0 0
      %1019 = vmatprep.subr.bf16.mxu0 0
      %1020 = vmatpush2.bf16.msra.mxu0 0
      %1021 = vmatprep.subr.bf16.mxu0 0
      %1022 = vmatpush2.bf16.msra.mxu0 0
      %1023 = vmatprep.mubr.bf16.mxu0 0
      %1024 = vmatmul.mubr.bf16.gmra.mxu0 %v770
      %v1025 = vpop.f32.mrf.mxu0
      %v1026 = vadd.f32 %v816, %v1025
      %v1027 = vpop.f32.mrf.mxu0
      %v1028 = vpop.f32.mrf.mxu0
      %v1029 = vadd.f32 %v816, %v1028
      %v1030 = vpop.f32.mrf.mxu0
      %1031 = vdwg.mxu0
      %v1032 = vpack.c.bf16 %v983, %v983
      %v1033 = vpack.c.bf16 %v987, %v987
      %v1034 = vpack.c.bf16 %v985, %v985
      %v1035 = vpack.c.bf16 %v989, %v989
      %v1036 = vpack.c.bf16 %v1026, %v1026
      %v1037 = vpack.c.bf16 %v1029, %v1029
      %v1038 = vlaneseq
      %v1039 = vand.u32 %v1038, 127
      %vm1040 = vcmp.ge.s32.totalorder %v1039, 0
      %vm1041 = vcmp.lt.s32.totalorder %v1039, 64
      %vm1042 = vmand %vm1040, %vm1041
      %v1043 = vsel %vm1042, 1, 0
      %vm1044 = vcmp.eq.s32.totalorder %v1043, 1
      %vm1045 = vmpackc.low %vm1044, %vm1044
      %v1046 = vsel %vm1045, %v1032, 0
      %v1047 = vsel %vm1045, %v1033, 0
      %1048 = vmatprep.subr.bf16.mxu0 0
      %1049 = vmatpush1.bf16.xpose.msra.mxu0 0
      %1050 = vmatprep.subr.bf16.mxu0 0
      %1051 = vmatpush1.bf16.xpose.msra.mxu0 0
      %1052 = vmatprep.subr.bf16.mxu0 0
      %1053 = vmatpush1.bf16.xpose.msra.mxu0 0
      %1054 = vmatprep.subr.bf16.mxu0 0
      %1055 = vmatpush1.bf16.xpose.msra.mxu0 0
      %1056 = vmatprep.subr.bf16.mxu0 0
      %1057 = vmatpush1.bf16.xpose.msra.mxu0 0
      %1058 = vmatprep.subr.bf16.mxu0 0
      %1059 = vmatpush1.bf16.xpose.msra.mxu0 0
      %1060 = vmatprep.subr.bf16.mxu0 0
      %1061 = vmatpush1.bf16.xpose.msra.mxu0 0
      %1062 = vmatprep.subr.bf16.mxu0 0
      %1063 = vmatpush1.bf16.xpose.msra.mxu0 %v1034
      %1064 = vmatprep.subr.bf16.mxu0 0
      %1065 = vmatpush2.bf16.xpose.msra.mxu0 0
      %1066 = vmatprep.subr.bf16.mxu0 0
      %1067 = vmatpush2.bf16.xpose.msra.mxu0 0
      %1068 = vmatprep.subr.bf16.mxu0 0
      %1069 = vmatpush2.bf16.xpose.msra.mxu0 0
      %1070 = vmatprep.subr.bf16.mxu0 0
      %1071 = vmatpush2.bf16.xpose.msra.mxu0 0
      %1072 = vmatprep.subr.bf16.mxu0 0
      %1073 = vmatpush2.bf16.xpose.msra.mxu0 0
      %1074 = vmatprep.subr.bf16.mxu0 0
      %1075 = vmatpush2.bf16.xpose.msra.mxu0 0
      %1076 = vmatprep.subr.bf16.mxu0 0
      %1077 = vmatpush2.bf16.xpose.msra.mxu0 0
      %1078 = vmatprep.subr.bf16.mxu0 0
      %1079 = vmatpush2.bf16.xpose.msra.mxu0 0
      %1080 = vmatprep.mubr.bf16.mxu0 0
      %1081 = vmatmul.mubr.bf16.gmra.mxu0 %v1046
      %v1082 = vpop.f32.mrf.mxu0
      %v1083 = vadd.f32 0.0, %v1082
      %v1084 = vpop.f32.mrf.mxu0
      %v1085 = vpop.f32.mrf.mxu0
      %v1086 = vpop.f32.mrf.mxu0
      %1087 = vdwg.mxu0
      %1088 = vmatprep.subr.bf16.mxu0 0
      %1089 = vmatpush1.bf16.xpose.msra.mxu0 0
      %1090 = vmatprep.subr.bf16.mxu0 0
      %1091 = vmatpush1.bf16.xpose.msra.mxu0 0
      %1092 = vmatprep.subr.bf16.mxu0 0
      %1093 = vmatpush1.bf16.xpose.msra.mxu0 0
      %1094 = vmatprep.subr.bf16.mxu0 0
      %1095 = vmatpush1.bf16.xpose.msra.mxu0 0
      %1096 = vmatprep.subr.bf16.mxu0 0
      %1097 = vmatpush1.bf16.xpose.msra.mxu0 0
      %1098 = vmatprep.subr.bf16.mxu0 0
      %1099 = vmatpush1.bf16.xpose.msra.mxu0 0
      %1100 = vmatprep.subr.bf16.mxu0 0
      %1101 = vmatpush1.bf16.xpose.msra.mxu0 0
      %1102 = vmatprep.subr.bf16.mxu0 0
      %1103 = vmatpush1.bf16.xpose.msra.mxu0 %v1035
      %1104 = vmatprep.subr.bf16.mxu0 0
      %1105 = vmatpush2.bf16.xpose.msra.mxu0 0
      %1106 = vmatprep.subr.bf16.mxu0 0
      %1107 = vmatpush2.bf16.xpose.msra.mxu0 0
      %1108 = vmatprep.subr.bf16.mxu0 0
      %1109 = vmatpush2.bf16.xpose.msra.mxu0 0
      %1110 = vmatprep.subr.bf16.mxu0 0
      %1111 = vmatpush2.bf16.xpose.msra.mxu0 0
      %1112 = vmatprep.subr.bf16.mxu0 0
      %1113 = vmatpush2.bf16.xpose.msra.mxu0 0
      %1114 = vmatprep.subr.bf16.mxu0 0
      %1115 = vmatpush2.bf16.xpose.msra.mxu0 0
      %1116 = vmatprep.subr.bf16.mxu0 0
      %1117 = vmatpush2.bf16.xpose.msra.mxu0 0
      %1118 = vmatprep.subr.bf16.mxu0 0
      %1119 = vmatpush2.bf16.xpose.msra.mxu0 0
      %1120 = vmatprep.mubr.bf16.mxu0 0
      %1121 = vmatmul.mubr.bf16.gmra.mxu0 %v1047
      %v1122 = vpop.f32.mrf.mxu0
      %v1123 = vadd.f32 0.0, %v1122
      %v1124 = vpop.f32.mrf.mxu0
      %v1125 = vpop.f32.mrf.mxu0
      %v1126 = vpop.f32.mrf.mxu0
      %1127 = vdwg.mxu0
      %v1128 = vmul.f32 %v1083, 0.125
      %v1129 = vmul.f32 %v1123, 0.125
      %vm1130 = vcmask 64512
      %v1131 = vsel %vm1130, %v1128, -inf
      %1132 = vmax.xlane.f32.xlu0 %v1131
      %v1133 = vpop.xlane.xlu0 %1132
      %v1134 = vsel %vm1130, %v1129, -inf
      %1135 = vmax.xlane.f32.xlu0 %v1134
      %v1136 = vpop.xlane.xlu0 %1135
      %v1137 = vsub.f32 %v1128, %v1133
      %v1138 = vsub.f32 %v1129, %v1136
      %v1139 = vmul.f32 %v1137, 1.442695
      %v1140 = vpow.pop %v1139
      %v1141 = vmul.f32 %v1138, 1.442695
      %v1142 = vpow.pop %v1141
      %v1143 = vsel %vm1130, %v1140, 0.0
      %1144 = vadd.xlane.f32.xlu0 %v1143
      %v1145 = vpop.xlane.xlu0 %1144
      %v1146 = vsel %vm1130, %v1142, 0.0
      %1147 = vadd.xlane.f32.xlu0 %v1146
      %v1148 = vpop.xlane.xlu0 %1147
      %v1149 = vrcp.pop %v1145
      %v1150 = vmul.f32 %v1140, %v1149
      %v1151 = vrcp.pop %v1148
      %v1152 = vmul.f32 %v1142, %v1151
      %v1153 = vsel %vm1045, %v1036, 0
      %v1154 = vsel %vm1045, %v1037, 0
      %v1155 = vpack.c.bf16 %v1150, %v1150
      %v1156 = vpack.c.bf16 %v1152, %v1152
      %vm1157 = vcmp.ge.s32.totalorder %v1039, 64
      %vm1158 = vcmp.lt.s32.totalorder %v1039, 128
      %vm1159 = vmand %vm1157, %vm1158
      %v1160 = vsel %vm1159, 1, 0
      %vm1161 = vcmp.eq.s32.totalorder %v1160, 1
      %vm1162 = vmpackc.low %vm1161, %vm1161
      %v1163 = vsel %vm1162, %v1032, 0
      %v1164 = vsel %vm1162, %v1033, 0
      %1165 = vmatprep.subr.bf16.mxu0 0
      %1166 = vmatpush1.bf16.xpose.msra.mxu0 0
      %1167 = vmatprep.subr.bf16.mxu0 0
      %1168 = vmatpush1.bf16.xpose.msra.mxu0 0
      %1169 = vmatprep.subr.bf16.mxu0 0
      %1170 = vmatpush1.bf16.xpose.msra.mxu0 0
      %1171 = vmatprep.subr.bf16.mxu0 0
      %1172 = vmatpush1.bf16.xpose.msra.mxu0 0
      %1173 = vmatprep.subr.bf16.mxu0 0
      %1174 = vmatpush1.bf16.xpose.msra.mxu0 0
      %1175 = vmatprep.subr.bf16.mxu0 0
      %1176 = vmatpush1.bf16.xpose.msra.mxu0 0
      %1177 = vmatprep.subr.bf16.mxu0 0
      %1178 = vmatpush1.bf16.xpose.msra.mxu0 0
      %1179 = vmatprep.subr.bf16.mxu0 0
      %1180 = vmatpush1.bf16.xpose.msra.mxu0 %v1034
      %1181 = vmatprep.subr.bf16.mxu0 0
      %1182 = vmatpush2.bf16.xpose.msra.mxu0 0
      %1183 = vmatprep.subr.bf16.mxu0 0
      %1184 = vmatpush2.bf16.xpose.msra.mxu0 0
      %1185 = vmatprep.subr.bf16.mxu0 0
      %1186 = vmatpush2.bf16.xpose.msra.mxu0 0
      %1187 = vmatprep.subr.bf16.mxu0 0
      %1188 = vmatpush2.bf16.xpose.msra.mxu0 0
      %1189 = vmatprep.subr.bf16.mxu0 0
      %1190 = vmatpush2.bf16.xpose.msra.mxu0 0
      %1191 = vmatprep.subr.bf16.mxu0 0
      %1192 = vmatpush2.bf16.xpose.msra.mxu0 0
      %1193 = vmatprep.subr.bf16.mxu0 0
      %1194 = vmatpush2.bf16.xpose.msra.mxu0 0
      %1195 = vmatprep.subr.bf16.mxu0 0
      %1196 = vmatpush2.bf16.xpose.msra.mxu0 0
      %1197 = vmatprep.mubr.bf16.mxu0 0
      %1198 = vmatmul.mubr.bf16.gmra.mxu0 %v1163
      %v1199 = vpop.f32.mrf.mxu0
      %v1200 = vadd.f32 0.0, %v1199
      %v1201 = vpop.f32.mrf.mxu0
      %v1202 = vpop.f32.mrf.mxu0
      %v1203 = vpop.f32.mrf.mxu0
      %1204 = vdwg.mxu0
      %1205 = vmatprep.subr.bf16.mxu0 0
      %1206 = vmatpush1.bf16.xpose.msra.mxu0 0
      %1207 = vmatprep.subr.bf16.mxu0 0
      %1208 = vmatpush1.bf16.xpose.msra.mxu0 0
      %1209 = vmatprep.subr.bf16.mxu0 0
      %1210 = vmatpush1.bf16.xpose.msra.mxu0 0
      %1211 = vmatprep.subr.bf16.mxu0 0
      %1212 = vmatpush1.bf16.xpose.msra.mxu0 0
      %1213 = vmatprep.subr.bf16.mxu0 0
      %1214 = vmatpush1.bf16.xpose.msra.mxu0 0
      %1215 = vmatprep.subr.bf16.mxu0 0
      %1216 = vmatpush1.bf16.xpose.msra.mxu0 0
      %1217 = vmatprep.subr.bf16.mxu0 0
      %1218 = vmatpush1.bf16.xpose.msra.mxu0 0
      %1219 = vmatprep.subr.bf16.mxu0 0
      %1220 = vmatpush1.bf16.xpose.msra.mxu0 %v1035
      %1221 = vmatprep.subr.bf16.mxu0 0
      %1222 = vmatpush2.bf16.xpose.msra.mxu0 0
      %1223 = vmatprep.subr.bf16.mxu0 0
      %1224 = vmatpush2.bf16.xpose.msra.mxu0 0
      %1225 = vmatprep.subr.bf16.mxu0 0
      %1226 = vmatpush2.bf16.xpose.msra.mxu0 0
      %1227 = vmatprep.subr.bf16.mxu0 0
      %1228 = vmatpush2.bf16.xpose.msra.mxu0 0
      %1229 = vmatprep.subr.bf16.mxu0 0
      %1230 = vmatpush2.bf16.xpose.msra.mxu0 0
      %1231 = vmatprep.subr.bf16.mxu0 0
      %1232 = vmatpush2.bf16.xpose.msra.mxu0 0
      %1233 = vmatprep.subr.bf16.mxu0 0
      %1234 = vmatpush2.bf16.xpose.msra.mxu0 0
      %1235 = vmatprep.subr.bf16.mxu0 0
      %1236 = vmatpush2.bf16.xpose.msra.mxu0 0
      %1237 = vmatprep.mubr.bf16.mxu0 0
      %1238 = vmatmul.mubr.bf16.gmra.mxu0 %v1164
      %v1239 = vpop.f32.mrf.mxu0
      %v1240 = vadd.f32 0.0, %v1239
      %v1241 = vpop.f32.mrf.mxu0
      %v1242 = vpop.f32.mrf.mxu0
      %v1243 = vpop.f32.mrf.mxu0
      %1244 = vdwg.mxu0
      %v1245 = vmul.f32 %v1200, 0.125
      %v1246 = vmul.f32 %v1240, 0.125
      %v1247 = vsel %vm1130, %v1245, -inf
      %1248 = vmax.xlane.f32.xlu0 %v1247
      %v1249 = vpop.xlane.xlu0 %1248
      %v1250 = vsel %vm1130, %v1246, -inf
      %1251 = vmax.xlane.f32.xlu0 %v1250
      %v1252 = vpop.xlane.xlu0 %1251
      %v1253 = vsub.f32 %v1245, %v1249
      %v1254 = vsub.f32 %v1246, %v1252
      %v1255 = vmul.f32 %v1253, 1.442695
      %v1256 = vpow.pop %v1255
      %v1257 = vmul.f32 %v1254, 1.442695
      %v1258 = vpow.pop %v1257
      %v1259 = vsel %vm1130, %v1256, 0.0
      %1260 = vadd.xlane.f32.xlu0 %v1259
      %v1261 = vpop.xlane.xlu0 %1260
      %v1262 = vsel %vm1130, %v1258, 0.0
      %1263 = vadd.xlane.f32.xlu0 %v1262
      %v1264 = vpop.xlane.xlu0 %1263
      %v1265 = vrcp.pop %v1261
      %v1266 = vmul.f32 %v1256, %v1265
      %v1267 = vrcp.pop %v1264
      %v1268 = vmul.f32 %v1258, %v1267
      %v1269 = vsel %vm1162, %v1036, 0
      %v1270 = vsel %vm1162, %v1037, 0
      %v1271 = vpack.c.bf16 %v1266, %v1266
      %v1272 = vpack.c.bf16 %v1268, %v1268
      %v1274 = vsel %vm1130, %v1271, 0
      %vm1276 = vcmask 1043456
      %v1278 = vsel %vm1276, %v1269, 0
      %1280 = vmatprep.subr.bf16.mxu0 0
      %1281 = vmatpush1.bf16.msra.mxu0 0
      %1282 = vmatprep.subr.bf16.mxu0 0
      %1283 = vmatpush1.bf16.msra.mxu0 0
      %1284 = vmatprep.subr.bf16.mxu0 0
      %1285 = vmatpush1.bf16.msra.mxu0 0
      %1286 = vmatprep.subr.bf16.mxu0 0
      %1287 = vmatpush1.bf16.msra.mxu0 0
      %1288 = vmatprep.subr.bf16.mxu0 0
      %1289 = vmatpush1.bf16.msra.mxu0 0
      %1290 = vmatprep.subr.bf16.mxu0 0
      %1291 = vmatpush1.bf16.msra.mxu0 0
      %1292 = vmatprep.subr.bf16.mxu0 0
      %1293 = vmatpush1.bf16.msra.mxu0 0
      %1294 = vmatprep.subr.bf16.mxu0 0
      %1295 = vmatpush1.bf16.msra.mxu0 %v1278
      %1296 = vmatprep.subr.bf16.mxu0 0
      %1297 = vmatpush2.bf16.msra.mxu0 0
      %1298 = vmatprep.subr.bf16.mxu0 0
      %1299 = vmatpush2.bf16.msra.mxu0 0
      %1300 = vmatprep.subr.bf16.mxu0 0
      %1301 = vmatpush2.bf16.msra.mxu0 0
      %1302 = vmatprep.subr.bf16.mxu0 0
      %1303 = vmatpush2.bf16.msra.mxu0 0
      %1304 = vmatprep.subr.bf16.mxu0 0
      %1305 = vmatpush2.bf16.msra.mxu0 0
      %1306 = vmatprep.subr.bf16.mxu0 0
      %1307 = vmatpush2.bf16.msra.mxu0 0
      %1308 = vmatprep.subr.bf16.mxu0 0
      %1309 = vmatpush2.bf16.msra.mxu0 0
      %1310 = vmatprep.subr.bf16.mxu0 0
      %1311 = vmatpush2.bf16.msra.mxu0 0
      %1312 = vmatprep.mubr.bf16.mxu0 0
      %1313 = vmatmul.mubr.bf16.gmra.mxu0 %v1274
      %v1314 = vpop.f32.mrf.mxu0
      %v1315 = vadd.f32 0.0, %v1314
      %v1316 = vpop.f32.mrf.mxu0
      %v1317 = vpop.f32.mrf.mxu0
      %v1318 = vpop.f32.mrf.mxu0
      %1319 = vdwg.mxu0
      %v1321 = vsel %vm1130, %v1272, 0
      %v1324 = vsel %vm1276, %v1270, 0
      %1326 = vmatprep.subr.bf16.mxu0 0
      %1327 = vmatpush1.bf16.msra.mxu0 0
      %1328 = vmatprep.subr.bf16.mxu0 0
      %1329 = vmatpush1.bf16.msra.mxu0 0
      %1330 = vmatprep.subr.bf16.mxu0 0
      %1331 = vmatpush1.bf16.msra.mxu0 0
      %1332 = vmatprep.subr.bf16.mxu0 0
      %1333 = vmatpush1.bf16.msra.mxu0 0
      %1334 = vmatprep.subr.bf16.mxu0 0
      %1335 = vmatpush1.bf16.msra.mxu0 0
      %1336 = vmatprep.subr.bf16.mxu0 0
      %1337 = vmatpush1.bf16.msra.mxu0 0
      %1338 = vmatprep.subr.bf16.mxu0 0
      %1339 = vmatpush1.bf16.msra.mxu0 0
      %1340 = vmatprep.subr.bf16.mxu0 0
      %1341 = vmatpush1.bf16.msra.mxu0 %v1324
      %1342 = vmatprep.subr.bf16.mxu0 0
      %1343 = vmatpush2.bf16.msra.mxu0 0
      %1344 = vmatprep.subr.bf16.mxu0 0
      %1345 = vmatpush2.bf16.msra.mxu0 0
      %1346 = vmatprep.subr.bf16.mxu0 0
      %1347 = vmatpush2.bf16.msra.mxu0 0
      %1348 = vmatprep.subr.bf16.mxu0 0
      %1349 = vmatpush2.bf16.msra.mxu0 0
      %1350 = vmatprep.subr.bf16.mxu0 0
      %1351 = vmatpush2.bf16.msra.mxu0 0
      %1352 = vmatprep.subr.bf16.mxu0 0
      %1353 = vmatpush2.bf16.msra.mxu0 0
      %1354 = vmatprep.subr.bf16.mxu0 0
      %1355 = vmatpush2.bf16.msra.mxu0 0
      %1356 = vmatprep.subr.bf16.mxu0 0
      %1357 = vmatpush2.bf16.msra.mxu0 0
      %1358 = vmatprep.mubr.bf16.mxu0 0
      %1359 = vmatmul.mubr.bf16.gmra.mxu0 %v1321
      %v1360 = vpop.f32.mrf.mxu0
      %v1361 = vadd.f32 0.0, %v1360
      %v1362 = vpop.f32.mrf.mxu0
      %v1363 = vpop.f32.mrf.mxu0
      %v1364 = vpop.f32.mrf.mxu0
      %1365 = vdwg.mxu0
      %v1367 = vsel %vm1130, %v1155, 0
      %v1370 = vsel %vm1276, %v1153, 0
      %1372 = vmatprep.subr.bf16.mxu0 0
      %1373 = vmatpush1.bf16.msra.mxu0 0
      %1374 = vmatprep.subr.bf16.mxu0 0
      %1375 = vmatpush1.bf16.msra.mxu0 0
      %1376 = vmatprep.subr.bf16.mxu0 0
      %1377 = vmatpush1.bf16.msra.mxu0 0
      %1378 = vmatprep.subr.bf16.mxu0 0
      %1379 = vmatpush1.bf16.msra.mxu0 0
      %1380 = vmatprep.subr.bf16.mxu0 0
      %1381 = vmatpush1.bf16.msra.mxu0 0
      %1382 = vmatprep.subr.bf16.mxu0 0
      %1383 = vmatpush1.bf16.msra.mxu0 0
      %1384 = vmatprep.subr.bf16.mxu0 0
      %1385 = vmatpush1.bf16.msra.mxu0 0
      %1386 = vmatprep.subr.bf16.mxu0 0
      %1387 = vmatpush1.bf16.msra.mxu0 %v1370
      %1388 = vmatprep.subr.bf16.mxu0 0
      %1389 = vmatpush2.bf16.msra.mxu0 0
      %1390 = vmatprep.subr.bf16.mxu0 0
      %1391 = vmatpush2.bf16.msra.mxu0 0
      %1392 = vmatprep.subr.bf16.mxu0 0
      %1393 = vmatpush2.bf16.msra.mxu0 0
      %1394 = vmatprep.subr.bf16.mxu0 0
      %1395 = vmatpush2.bf16.msra.mxu0 0
      %1396 = vmatprep.subr.bf16.mxu0 0
      %1397 = vmatpush2.bf16.msra.mxu0 0
      %1398 = vmatprep.subr.bf16.mxu0 0
      %1399 = vmatpush2.bf16.msra.mxu0 0
      %1400 = vmatprep.subr.bf16.mxu0 0
      %1401 = vmatpush2.bf16.msra.mxu0 0
      %1402 = vmatprep.subr.bf16.mxu0 0
      %1403 = vmatpush2.bf16.msra.mxu0 0
      %1404 = vmatprep.mubr.bf16.mxu0 0
      %1405 = vmatmul.mubr.bf16.gmra.mxu0 %v1367
      %v1406 = vpop.f32.mrf.mxu0
      %v1407 = vadd.f32 %v1315, %v1406
      %v1408 = vpop.f32.mrf.mxu0
      %v1409 = vpop.f32.mrf.mxu0
      %v1410 = vpop.f32.mrf.mxu0
      %1411 = vdwg.mxu0
      %v1413 = vsel %vm1130, %v1156, 0
      %v1416 = vsel %vm1276, %v1154, 0
      %1418 = vmatprep.subr.bf16.mxu0 0
      %1419 = vmatpush1.bf16.msra.mxu0 0
      %1420 = vmatprep.subr.bf16.mxu0 0
      %1421 = vmatpush1.bf16.msra.mxu0 0
      %1422 = vmatprep.subr.bf16.mxu0 0
      %1423 = vmatpush1.bf16.msra.mxu0 0
      %1424 = vmatprep.subr.bf16.mxu0 0
      %1425 = vmatpush1.bf16.msra.mxu0 0
      %1426 = vmatprep.subr.bf16.mxu0 0
      %1427 = vmatpush1.bf16.msra.mxu0 0
      %1428 = vmatprep.subr.bf16.mxu0 0
      %1429 = vmatpush1.bf16.msra.mxu0 0
      %1430 = vmatprep.subr.bf16.mxu0 0
      %1431 = vmatpush1.bf16.msra.mxu0 0
      %1432 = vmatprep.subr.bf16.mxu0 0
      %1433 = vmatpush1.bf16.msra.mxu0 %v1416
      %1434 = vmatprep.subr.bf16.mxu0 0
      %1435 = vmatpush2.bf16.msra.mxu0 0
      %1436 = vmatprep.subr.bf16.mxu0 0
      %1437 = vmatpush2.bf16.msra.mxu0 0
      %1438 = vmatprep.subr.bf16.mxu0 0
      %1439 = vmatpush2.bf16.msra.mxu0 0
      %1440 = vmatprep.subr.bf16.mxu0 0
      %1441 = vmatpush2.bf16.msra.mxu0 0
      %1442 = vmatprep.subr.bf16.mxu0 0
      %1443 = vmatpush2.bf16.msra.mxu0 0
      %1444 = vmatprep.subr.bf16.mxu0 0
      %1445 = vmatpush2.bf16.msra.mxu0 0
      %1446 = vmatprep.subr.bf16.mxu0 0
      %1447 = vmatpush2.bf16.msra.mxu0 0
      %1448 = vmatprep.subr.bf16.mxu0 0
      %1449 = vmatpush2.bf16.msra.mxu0 0
      %1450 = vmatprep.mubr.bf16.mxu0 0
      %1451 = vmatmul.mubr.bf16.gmra.mxu0 %v1413
      %v1452 = vpop.f32.mrf.mxu0
      %v1453 = vadd.f32 %v1361, %v1452
      %v1454 = vpop.f32.mrf.mxu0
      %v1455 = vpop.f32.mrf.mxu0
      %v1456 = vpop.f32.mrf.mxu0
      %1457 = vdwg.mxu0
      %v1458 = vpack.c.bf16 %v1453, %v1407
      %v1459 = vld [vmem:[#allocation9] sm:$0xf]
      %v1460 = vld [vmem:[#allocation9 + $0x4] sm:$0xf]
      %v1461 = vld [vmem:[#allocation9 + $0x8] sm:$0xf]
      %v1462 = vld [vmem:[#allocation9 + $0xc] sm:$0xf]
      %v1463 = vld [vmem:[#allocation9 + $0x10] sm:$0xf]
      %v1464 = vld [vmem:[#allocation9 + $0x14] sm:$0xf]
      %v1465 = vld [vmem:[#allocation9 + $0x18] sm:$0xf]
      %v1466 = vld [vmem:[#allocation9 + $0x1c] sm:$0xf]
      %v1467 = vld [vmem:[#allocation9 + $0x20] sm:$0xf]
      %v1468 = vld [vmem:[#allocation9 + $0x24] sm:$0xf]
      %v1469 = vld [vmem:[#allocation9 + $0x28] sm:$0xf]
      %v1470 = vld [vmem:[#allocation9 + $0x2c] sm:$0xf]
      %v1471 = vld [vmem:[#allocation9 + $0x30] sm:$0xf]
      %v1472 = vld [vmem:[#allocation9 + $0x34] sm:$0xf]
      %v1473 = vld [vmem:[#allocation9 + $0x38] sm:$0xf]
      %v1474 = vld [vmem:[#allocation9 + $0x3c] sm:$0xf]
      %v1475 = vld [vmem:[#allocation11] sm:$0x1]
      %v1477 = vlaneseq
      %v1478 = vshrl.u32 %v1477, 7
      %v1479 = vsub.s32 0, %v1478
      %v1480 = vrot.slane %v1475, %v1479
      %v1498 = vunpack.c.l.b16 %v1459
      %v1499 = vunpack.c.l.b16 %v1460
      %v1500 = vunpack.c.l.b16 %v1461
      %v1501 = vunpack.c.l.b16 %v1462
      %v1502 = vunpack.c.l.b16 %v1463
      %v1503 = vunpack.c.l.b16 %v1464
      %v1504 = vunpack.c.l.b16 %v1465
      %v1505 = vunpack.c.l.b16 %v1466
      %v1506 = vunpack.c.l.b16 %v1467
      %v1507 = vunpack.c.l.b16 %v1468
      %v1508 = vunpack.c.l.b16 %v1469
      %v1509 = vunpack.c.l.b16 %v1470
      %v1510 = vunpack.c.l.b16 %v1471
      %v1511 = vunpack.c.l.b16 %v1472
      %v1512 = vunpack.c.l.b16 %v1473
      %v1513 = vunpack.c.l.b16 %v1474
      %v1514 = vpack.c.b16 %v1499, %v1498
      %v1515 = vpack.c.b16 %v1501, %v1500
      %v1516 = vpack.c.b16 %v1503, %v1502
      %v1517 = vpack.c.b16 %v1505, %v1504
      %v1518 = vpack.c.b16 %v1507, %v1506
      %v1519 = vpack.c.b16 %v1509, %v1508
      %v1520 = vpack.c.b16 %v1511, %v1510
      %v1521 = vpack.c.b16 %v1513, %v1512
      %1530 = vmatprep.subr.bf16.mxu0 0
      %1531 = vmatpush1.bf16.msra.mxu0 %v1521
      %1532 = vmatprep.subr.bf16.mxu0 0
      %1533 = vmatpush1.bf16.msra.mxu0 %v1520
      %1534 = vmatprep.subr.bf16.mxu0 0
      %1535 = vmatpush1.bf16.msra.mxu0 %v1519
      %1536 = vmatprep.subr.bf16.mxu0 0
      %1537 = vmatpush1.bf16.msra.mxu0 %v1518
      %1538 = vmatprep.subr.bf16.mxu0 0
      %1539 = vmatpush1.bf16.msra.mxu0 %v1517
      %1540 = vmatprep.subr.bf16.mxu0 0
      %1541 = vmatpush1.bf16.msra.mxu0 %v1516
      %1542 = vmatprep.subr.bf16.mxu0 0
      %1543 = vmatpush1.bf16.msra.mxu0 %v1515
      %1544 = vmatprep.subr.bf16.mxu0 0
      %1545 = vmatpush1.bf16.msra.mxu0 %v1514
      %1546 = vmatprep.subr.bf16.mxu0 0
      %1547 = vmatpush2.bf16.msra.mxu0 0
      %1548 = vmatprep.subr.bf16.mxu0 0
      %1549 = vmatpush2.bf16.msra.mxu0 0
      %1550 = vmatprep.subr.bf16.mxu0 0
      %1551 = vmatpush2.bf16.msra.mxu0 0
      %1552 = vmatprep.subr.bf16.mxu0 0
      %1553 = vmatpush2.bf16.msra.mxu0 0
      %1554 = vmatprep.subr.bf16.mxu0 0
      %1555 = vmatpush2.bf16.msra.mxu0 0
      %1556 = vmatprep.subr.bf16.mxu0 0
      %1557 = vmatpush2.bf16.msra.mxu0 0
      %1558 = vmatprep.subr.bf16.mxu0 0
      %1559 = vmatpush2.bf16.msra.mxu0 0
      %1560 = vmatprep.subr.bf16.mxu0 0
      %1561 = vmatpush2.bf16.msra.mxu0 0
      %1562 = vmatprep.mubr.bf16.mxu0 0
      %1563 = vmatmul.mubr.bf16.gmra.mxu0 %v1458
      %v1564 = vpop.f32.mrf.mxu0
      %v1565 = vadd.f32 %v1480, %v1564
      %v1566 = vpop.f32.mrf.mxu0
      %v1567 = vpop.f32.mrf.mxu0
      %v1568 = vadd.f32 %v1480, %v1567
      %v1569 = vpop.f32.mrf.mxu0
      %1570 = vdwg.mxu0
      %v1571 = vadd.f32 %v727, %v1565
      %v1572 = vadd.f32 %v728, %v1568
      %v1573 = vld [vmem:[#allocation12] sm:$0x1]
      %v1574 = vld [vmem:[#allocation14] sm:$0x1]
      %1575 = vadd.xlane.f32.xlu0 %v1571
      %v1576 = vpop.xlane.xlu0 %1575
      %1577 = vadd.xlane.f32.xlu0 %v1572
      %v1578 = vpop.xlane.xlu0 %1577
      %v1579 = vmul.f32 %v1576, %v735
      %v1580 = vmul.f32 %v1578, %v735
      %v1581 = vsub.f32 %v1571, %v1579
      %v1582 = vsub.f32 %v1572, %v1580
      %v1583 = vmul.f32 %v1581, %v1581
      %v1584 = vmul.f32 %v1582, %v1582
      %1585 = vadd.xlane.f32.xlu0 %v1583
      %v1586 = vpop.xlane.xlu0 %1585
      %1587 = vadd.xlane.f32.xlu0 %v1584
      %v1588 = vpop.xlane.xlu0 %1587
      %v1589 = vmul.f32 %v1586, %v735
      %v1590 = vmul.f32 %v1588, %v735
      %v1591 = vadd.f32 %v1589, 1e-12
      %v1592 = vadd.f32 %v1590, 1e-12
      %v1593 = vrsqrt.pop %v1591
      %v1594 = vrsqrt.pop %v1592
      %v1595 = vmul.f32 %v1581, %v1593
      %v1596 = vmul.f32 %v1582, %v1594
      %v1598 = vlaneseq
      %v1599 = vshrl.u32 %v1598, 7
      %v1600 = vsub.s32 0, %v1599
      %v1601 = vrot.slane %v1573, %v1600
      %v1603 = vmul.f32 %v1601, %v1595
      %v1604 = vmul.f32 %v1601, %v1596
      %v1606 = vlaneseq
      %v1607 = vshrl.u32 %v1606, 7
      %v1608 = vsub.s32 0, %v1607
      %v1609 = vrot.slane %v1574, %v1608
      %v1611 = vadd.f32 %v1603, %v1609
      %v1612 = vadd.f32 %v1604, %v1609
      %v1613 = vpack.c.bf16 %v1612, %v1611
      %v1614 = vld [vmem:[%s12] sm:$0xff]
      %v1615 = vld [vmem:[%s12 + $0x8] sm:$0xff]
      %v1616 = vld [vmem:[%s12 + $0x10] sm:$0xff]
      %v1617 = vld [vmem:[%s12 + $0x18] sm:$0xff]
      %v1618 = vld [vmem:[%s12 + $0x20] sm:$0xff]
      %v1619 = vld [vmem:[%s12 + $0x28] sm:$0xff]
      %v1620 = vld [vmem:[%s12 + $0x30] sm:$0xff]
      %v1621 = vld [vmem:[%s12 + $0x38] sm:$0xff]
      %v1622 = vld [vmem:[%s12 + $0x40] sm:$0xff]
      %v1623 = vld [vmem:[%s12 + $0x48] sm:$0xff]
      %v1624 = vld [vmem:[%s12 + $0x50] sm:$0xff]
      %v1625 = vld [vmem:[%s12 + $0x58] sm:$0xff]
      %v1626 = vld [vmem:[%s12 + $0x60] sm:$0xff]
      %v1627 = vld [vmem:[%s12 + $0x68] sm:$0xff]
      %v1628 = vld [vmem:[%s12 + $0x70] sm:$0xff]
      %v1629 = vld [vmem:[%s12 + $0x78] sm:$0xff]
      %v1630 = vld [vmem:[%s12 + $0x80] sm:$0xff]
      %v1631 = vld [vmem:[%s12 + $0x88] sm:$0xff]
      %v1632 = vld [vmem:[%s12 + $0x90] sm:$0xff]
      %v1633 = vld [vmem:[%s12 + $0x98] sm:$0xff]
      %v1634 = vld [vmem:[%s12 + $0xa0] sm:$0xff]
      %v1635 = vld [vmem:[%s12 + $0xa8] sm:$0xff]
      %v1636 = vld [vmem:[%s12 + $0xb0] sm:$0xff]
      %v1637 = vld [vmem:[%s12 + $0xb8] sm:$0xff]
      %v1638 = vld [vmem:[%s12 + $0xc0] sm:$0xff]
      %v1639 = vld [vmem:[%s12 + $0xc8] sm:$0xff]
      %v1640 = vld [vmem:[%s12 + $0xd0] sm:$0xff]
      %v1641 = vld [vmem:[%s12 + $0xd8] sm:$0xff]
      %v1642 = vld [vmem:[%s12 + $0xe0] sm:$0xff]
      %v1643 = vld [vmem:[%s12 + $0xe8] sm:$0xff]
      %v1644 = vld [vmem:[%s12 + $0xf0] sm:$0xff]
      %v1645 = vld [vmem:[%s12 + $0xf8] sm:$0xff]
      %v1646 = vld [vmem:[%s13] sm:$0xf]
      %v1648 = vlaneseq
      %v1649 = vshrl.u32 %v1648, 7
      %v1650 = vsub.s32 0, %v1649
      %v1651 = vrot.slane %v1646, %v1650
      %v1652 = vlaneseq
      %v1653 = vshrl.u32 %v1652, 7
      %v1654 = vsub.s32 1, %v1653
      %v1655 = vrot.slane %v1646, %v1654
      %v1656 = vlaneseq
      %v1657 = vshrl.u32 %v1656, 7
      %v1658 = vsub.s32 2, %v1657
      %v1659 = vrot.slane %v1646, %v1658
      %v1660 = vlaneseq
      %v1661 = vshrl.u32 %v1660, 7
      %v1662 = vsub.s32 3, %v1661
      %v1663 = vrot.slane %v1646, %v1662
      %v1700 = vunpack.c.l.b16 %v1614
      %v1701 = vunpack.c.h.b16 %v1614
      %v1702 = vunpack.c.l.b16 %v1615
      %v1703 = vunpack.c.h.b16 %v1615
      %v1704 = vunpack.c.l.b16 %v1616
      %v1705 = vunpack.c.h.b16 %v1616
      %v1706 = vunpack.c.l.b16 %v1617
      %v1707 = vunpack.c.h.b16 %v1617
      %v1708 = vunpack.c.l.b16 %v1618
      %v1709 = vunpack.c.h.b16 %v1618
      %v1710 = vunpack.c.l.b16 %v1619
      %v1711 = vunpack.c.h.b16 %v1619
      %v1712 = vunpack.c.l.b16 %v1620
      %v1713 = vunpack.c.h.b16 %v1620
      %v1714 = vunpack.c.l.b16 %v1621
      %v1715 = vunpack.c.h.b16 %v1621
      %v1716 = vunpack.c.l.b16 %v1622
      %v1717 = vunpack.c.h.b16 %v1622
      %v1718 = vunpack.c.l.b16 %v1623
      %v1719 = vunpack.c.h.b16 %v1623
      %v1720 = vunpack.c.l.b16 %v1624
      %v1721 = vunpack.c.h.b16 %v1624
      %v1722 = vunpack.c.l.b16 %v1625
      %v1723 = vunpack.c.h.b16 %v1625
      %v1724 = vunpack.c.l.b16 %v1626
      %v1725 = vunpack.c.h.b16 %v1626
      %v1726 = vunpack.c.l.b16 %v1627
      %v1727 = vunpack.c.h.b16 %v1627
      %v1728 = vunpack.c.l.b16 %v1628
      %v1729 = vunpack.c.h.b16 %v1628
      %v1730 = vunpack.c.l.b16 %v1629
      %v1731 = vunpack.c.h.b16 %v1629
      %v1732 = vunpack.c.l.b16 %v1630
      %v1733 = vunpack.c.h.b16 %v1630
      %v1734 = vunpack.c.l.b16 %v1631
      %v1735 = vunpack.c.h.b16 %v1631
      %v1736 = vunpack.c.l.b16 %v1632
      %v1737 = vunpack.c.h.b16 %v1632
      %v1738 = vunpack.c.l.b16 %v1633
      %v1739 = vunpack.c.h.b16 %v1633
      %v1740 = vunpack.c.l.b16 %v1634
      %v1741 = vunpack.c.h.b16 %v1634
      %v1742 = vunpack.c.l.b16 %v1635
      %v1743 = vunpack.c.h.b16 %v1635
      %v1744 = vunpack.c.l.b16 %v1636
      %v1745 = vunpack.c.h.b16 %v1636
      %v1746 = vunpack.c.l.b16 %v1637
      %v1747 = vunpack.c.h.b16 %v1637
      %v1748 = vunpack.c.l.b16 %v1638
      %v1749 = vunpack.c.h.b16 %v1638
      %v1750 = vunpack.c.l.b16 %v1639
      %v1751 = vunpack.c.h.b16 %v1639
      %v1752 = vunpack.c.l.b16 %v1640
      %v1753 = vunpack.c.h.b16 %v1640
      %v1754 = vunpack.c.l.b16 %v1641
      %v1755 = vunpack.c.h.b16 %v1641
      %v1756 = vunpack.c.l.b16 %v1642
      %v1757 = vunpack.c.h.b16 %v1642
      %v1758 = vunpack.c.l.b16 %v1643
      %v1759 = vunpack.c.h.b16 %v1643
      %v1760 = vunpack.c.l.b16 %v1644
      %v1761 = vunpack.c.h.b16 %v1644
      %v1762 = vunpack.c.l.b16 %v1645
      %v1763 = vunpack.c.h.b16 %v1645
      %v1764 = vpack.c.b16 %v1704, %v1700
      %v1765 = vpack.c.b16 %v1705, %v1701
      %v1766 = vpack.c.b16 %v1706, %v1702
      %v1767 = vpack.c.b16 %v1707, %v1703
      %v1768 = vpack.c.b16 %v1712, %v1708
      %v1769 = vpack.c.b16 %v1713, %v1709
      %v1770 = vpack.c.b16 %v1714, %v1710
      %v1771 = vpack.c.b16 %v1715, %v1711
      %v1772 = vpack.c.b16 %v1720, %v1716
      %v1773 = vpack.c.b16 %v1721, %v1717
      %v1774 = vpack.c.b16 %v1722, %v1718
      %v1775 = vpack.c.b16 %v1723, %v1719
      %v1776 = vpack.c.b16 %v1728, %v1724
      %v1777 = vpack.c.b16 %v1729, %v1725
      %v1778 = vpack.c.b16 %v1730, %v1726
      %v1779 = vpack.c.b16 %v1731, %v1727
      %v1780 = vpack.c.b16 %v1736, %v1732
      %v1781 = vpack.c.b16 %v1737, %v1733
      %v1782 = vpack.c.b16 %v1738, %v1734
      %v1783 = vpack.c.b16 %v1739, %v1735
      %v1784 = vpack.c.b16 %v1744, %v1740
      %v1785 = vpack.c.b16 %v1745, %v1741
      %v1786 = vpack.c.b16 %v1746, %v1742
      %v1787 = vpack.c.b16 %v1747, %v1743
      %v1788 = vpack.c.b16 %v1752, %v1748
      %v1789 = vpack.c.b16 %v1753, %v1749
      %v1790 = vpack.c.b16 %v1754, %v1750
      %v1791 = vpack.c.b16 %v1755, %v1751
      %v1792 = vpack.c.b16 %v1760, %v1756
      %v1793 = vpack.c.b16 %v1761, %v1757
      %v1794 = vpack.c.b16 %v1762, %v1758
      %v1795 = vpack.c.b16 %v1763, %v1759
      %1828 = vmatprep.subr.bf16.mxu0 %v1793
      %1829 = vmatpush1.bf16.msra.mxu0 %v1792
      %1830 = vmatprep.subr.bf16.mxu0 %v1789
      %1831 = vmatpush1.bf16.msra.mxu0 %v1788
      %1832 = vmatprep.subr.bf16.mxu0 %v1785
      %1833 = vmatpush1.bf16.msra.mxu0 %v1784
      %1834 = vmatprep.subr.bf16.mxu0 %v1781
      %1835 = vmatpush1.bf16.msra.mxu0 %v1780
      %1836 = vmatprep.subr.bf16.mxu0 %v1777
      %1837 = vmatpush1.bf16.msra.mxu0 %v1776
      %1838 = vmatprep.subr.bf16.mxu0 %v1773
      %1839 = vmatpush1.bf16.msra.mxu0 %v1772
      %1840 = vmatprep.subr.bf16.mxu0 %v1769
      %1841 = vmatpush1.bf16.msra.mxu0 %v1768
      %1842 = vmatprep.subr.bf16.mxu0 %v1765
      %1843 = vmatpush1.bf16.msra.mxu0 %v1764
      %1844 = vmatprep.subr.bf16.mxu0 0
      %1845 = vmatpush2.bf16.msra.mxu0 0
      %1846 = vmatprep.subr.bf16.mxu0 0
      %1847 = vmatpush2.bf16.msra.mxu0 0
      %1848 = vmatprep.subr.bf16.mxu0 0
      %1849 = vmatpush2.bf16.msra.mxu0 0
      %1850 = vmatprep.subr.bf16.mxu0 0
      %1851 = vmatpush2.bf16.msra.mxu0 0
      %1852 = vmatprep.subr.bf16.mxu0 0
      %1853 = vmatpush2.bf16.msra.mxu0 0
      %1854 = vmatprep.subr.bf16.mxu0 0
      %1855 = vmatpush2.bf16.msra.mxu0 0
      %1856 = vmatprep.subr.bf16.mxu0 0
      %1857 = vmatpush2.bf16.msra.mxu0 0
      %1858 = vmatprep.subr.bf16.mxu0 0
      %1859 = vmatpush2.bf16.msra.mxu0 0
      %1860 = vmatprep.mubr.bf16.mxu0 0
      %1861 = vmatmul.mubr.bf16.gmra.mxu0 %v1613
      %v1862 = vpop.f32.mrf.mxu0
      %v1863 = vadd.f32 %v1651, %v1862
      %v1864 = vpop.f32.mrf.mxu0
      %v1865 = vadd.f32 %v1655, %v1864
      %v1866 = vpop.f32.mrf.mxu0
      %v1867 = vadd.f32 %v1651, %v1866
      %v1868 = vpop.f32.mrf.mxu0
      %v1869 = vadd.f32 %v1655, %v1868
      %1870 = vdwg.mxu0
      %1871 = vmatprep.subr.bf16.mxu0 %v1795
      %1872 = vmatpush1.bf16.msra.mxu0 %v1794
      %1873 = vmatprep.subr.bf16.mxu0 %v1791
      %1874 = vmatpush1.bf16.msra.mxu0 %v1790
      %1875 = vmatprep.subr.bf16.mxu0 %v1787
      %1876 = vmatpush1.bf16.msra.mxu0 %v1786
      %1877 = vmatprep.subr.bf16.mxu0 %v1783
      %1878 = vmatpush1.bf16.msra.mxu0 %v1782
      %1879 = vmatprep.subr.bf16.mxu0 %v1779
      %1880 = vmatpush1.bf16.msra.mxu0 %v1778
      %1881 = vmatprep.subr.bf16.mxu0 %v1775
      %1882 = vmatpush1.bf16.msra.mxu0 %v1774
      %1883 = vmatprep.subr.bf16.mxu0 %v1771
      %1884 = vmatpush1.bf16.msra.mxu0 %v1770
      %1885 = vmatprep.subr.bf16.mxu0 %v1767
      %1886 = vmatpush1.bf16.msra.mxu0 %v1766
      %1887 = vmatprep.subr.bf16.mxu0 0
      %1888 = vmatpush2.bf16.msra.mxu0 0
      %1889 = vmatprep.subr.bf16.mxu0 0
      %1890 = vmatpush2.bf16.msra.mxu0 0
      %1891 = vmatprep.subr.bf16.mxu0 0
      %1892 = vmatpush2.bf16.msra.mxu0 0
      %1893 = vmatprep.subr.bf16.mxu0 0
      %1894 = vmatpush2.bf16.msra.mxu0 0
      %1895 = vmatprep.subr.bf16.mxu0 0
      %1896 = vmatpush2.bf16.msra.mxu0 0
      %1897 = vmatprep.subr.bf16.mxu0 0
      %1898 = vmatpush2.bf16.msra.mxu0 0
      %1899 = vmatprep.subr.bf16.mxu0 0
      %1900 = vmatpush2.bf16.msra.mxu0 0
      %1901 = vmatprep.subr.bf16.mxu0 0
      %1902 = vmatpush2.bf16.msra.mxu0 0
      %1903 = vmatprep.mubr.bf16.mxu0 0
      %1904 = vmatmul.mubr.bf16.gmra.mxu0 %v1613
      %v1905 = vpop.f32.mrf.mxu0
      %v1906 = vadd.f32 %v1659, %v1905
      %v1907 = vpop.f32.mrf.mxu0
      %v1908 = vadd.f32 %v1663, %v1907
      %v1909 = vpop.f32.mrf.mxu0
      %v1910 = vadd.f32 %v1659, %v1909
      %v1911 = vpop.f32.mrf.mxu0
      %v1912 = vadd.f32 %v1663, %v1911
      %1913 = vdwg.mxu0
      %v1914 = vmul.f32 %v1863, -1.702
      %v1915 = vmul.f32 %v1865, -1.702
      %v1916 = vmul.f32 %v1906, -1.702
      %v1917 = vmul.f32 %v1908, -1.702
      %v1918 = vmul.f32 %v1867, -1.702
      %v1919 = vmul.f32 %v1869, -1.702
      %v1920 = vmul.f32 %v1910, -1.702
      %v1921 = vmul.f32 %v1912, -1.702
      %v1922 = vmul.f32 %v1914, 1.442695
      %v1923 = vpow.pop %v1922
      %v1924 = vmul.f32 %v1915, 1.442695
      %v1925 = vpow.pop %v1924
      %v1926 = vmul.f32 %v1916, 1.442695
      %v1927 = vpow.pop %v1926
      %v1928 = vmul.f32 %v1917, 1.442695
      %v1929 = vpow.pop %v1928
      %v1930 = vmul.f32 %v1918, 1.442695
      %v1931 = vpow.pop %v1930
      %v1932 = vmul.f32 %v1919, 1.442695
      %v1933 = vpow.pop %v1932
      %v1934 = vmul.f32 %v1920, 1.442695
      %v1935 = vpow.pop %v1934
      %v1936 = vmul.f32 %v1921, 1.442695
      %v1937 = vpow.pop %v1936
      %v1938 = vadd.f32 %v1923, 1.0
      %v1939 = vadd.f32 %v1925, 1.0
      %v1940 = vadd.f32 %v1927, 1.0
      %v1941 = vadd.f32 %v1929, 1.0
      %v1942 = vadd.f32 %v1931, 1.0
      %v1943 = vadd.f32 %v1933, 1.0
      %v1944 = vadd.f32 %v1935, 1.0
      %v1945 = vadd.f32 %v1937, 1.0
      %v1946 = vrcp.pop %v1938
      %v1947 = vmul.f32 %v1863, %v1946
      %v1948 = vrcp.pop %v1939
      %v1949 = vmul.f32 %v1865, %v1948
      %v1950 = vrcp.pop %v1940
      %v1951 = vmul.f32 %v1906, %v1950
      %v1952 = vrcp.pop %v1941
      %v1953 = vmul.f32 %v1908, %v1952
      %v1954 = vrcp.pop %v1942
      %v1955 = vmul.f32 %v1867, %v1954
      %v1956 = vrcp.pop %v1943
      %v1957 = vmul.f32 %v1869, %v1956
      %v1958 = vrcp.pop %v1944
      %v1959 = vmul.f32 %v1910, %v1958
      %v1960 = vrcp.pop %v1945
      %v1961 = vmul.f32 %v1912, %v1960
      %v1962 = vpack.c.bf16 %v1955, %v1947
      %v1963 = vpack.c.bf16 %v1957, %v1949
      %v1964 = vpack.c.bf16 %v1959, %v1951
      %v1965 = vpack.c.bf16 %v1961, %v1953
      %v1966 = vld [vmem:[%s14] sm:$0xf]
      %v1967 = vld [vmem:[%s14 + $0x4] sm:$0xf]
      %v1968 = vld [vmem:[%s14 + $0x8] sm:$0xf]
      %v1969 = vld [vmem:[%s14 + $0xc] sm:$0xf]
      %v1970 = vld [vmem:[%s14 + $0x10] sm:$0xf]
      %v1971 = vld [vmem:[%s14 + $0x14] sm:$0xf]
      %v1972 = vld [vmem:[%s14 + $0x18] sm:$0xf]
      %v1973 = vld [vmem:[%s14 + $0x1c] sm:$0xf]
      %v1974 = vld [vmem:[%s14 + $0x20] sm:$0xf]
      %v1975 = vld [vmem:[%s14 + $0x24] sm:$0xf]
      %v1976 = vld [vmem:[%s14 + $0x28] sm:$0xf]
      %v1977 = vld [vmem:[%s14 + $0x2c] sm:$0xf]
      %v1978 = vld [vmem:[%s14 + $0x30] sm:$0xf]
      %v1979 = vld [vmem:[%s14 + $0x34] sm:$0xf]
      %v1980 = vld [vmem:[%s14 + $0x38] sm:$0xf]
      %v1981 = vld [vmem:[%s14 + $0x3c] sm:$0xf]
      %v1982 = vld [vmem:[%s14 + $0x40] sm:$0xf]
      %v1983 = vld [vmem:[%s14 + $0x44] sm:$0xf]
      %v1984 = vld [vmem:[%s14 + $0x48] sm:$0xf]
      %v1985 = vld [vmem:[%s14 + $0x4c] sm:$0xf]
      %v1986 = vld [vmem:[%s14 + $0x50] sm:$0xf]
      %v1987 = vld [vmem:[%s14 + $0x54] sm:$0xf]
      %v1988 = vld [vmem:[%s14 + $0x58] sm:$0xf]
      %v1989 = vld [vmem:[%s14 + $0x5c] sm:$0xf]
      %v1990 = vld [vmem:[%s14 + $0x60] sm:$0xf]
      %v1991 = vld [vmem:[%s14 + $0x64] sm:$0xf]
      %v1992 = vld [vmem:[%s14 + $0x68] sm:$0xf]
      %v1993 = vld [vmem:[%s14 + $0x6c] sm:$0xf]
      %v1994 = vld [vmem:[%s14 + $0x70] sm:$0xf]
      %v1995 = vld [vmem:[%s14 + $0x74] sm:$0xf]
      %v1996 = vld [vmem:[%s14 + $0x78] sm:$0xf]
      %v1997 = vld [vmem:[%s14 + $0x7c] sm:$0xf]
      %v1998 = vld [vmem:[%s14 + $0x80] sm:$0xf]
      %v1999 = vld [vmem:[%s14 + $0x84] sm:$0xf]
      %v2000 = vld [vmem:[%s14 + $0x88] sm:$0xf]
      %v2001 = vld [vmem:[%s14 + $0x8c] sm:$0xf]
      %v2002 = vld [vmem:[%s14 + $0x90] sm:$0xf]
      %v2003 = vld [vmem:[%s14 + $0x94] sm:$0xf]
      %v2004 = vld [vmem:[%s14 + $0x98] sm:$0xf]
      %v2005 = vld [vmem:[%s14 + $0x9c] sm:$0xf]
      %v2006 = vld [vmem:[%s14 + $0xa0] sm:$0xf]
      %v2007 = vld [vmem:[%s14 + $0xa4] sm:$0xf]
      %v2008 = vld [vmem:[%s14 + $0xa8] sm:$0xf]
      %v2009 = vld [vmem:[%s14 + $0xac] sm:$0xf]
      %v2010 = vld [vmem:[%s14 + $0xb0] sm:$0xf]
      %v2011 = vld [vmem:[%s14 + $0xb4] sm:$0xf]
      %v2012 = vld [vmem:[%s14 + $0xb8] sm:$0xf]
      %v2013 = vld [vmem:[%s14 + $0xbc] sm:$0xf]
      %v2014 = vld [vmem:[%s14 + $0xc0] sm:$0xf]
      %v2015 = vld [vmem:[%s14 + $0xc4] sm:$0xf]
      %v2016 = vld [vmem:[%s14 + $0xc8] sm:$0xf]
      %v2017 = vld [vmem:[%s14 + $0xcc] sm:$0xf]
      %v2018 = vld [vmem:[%s14 + $0xd0] sm:$0xf]
      %v2019 = vld [vmem:[%s14 + $0xd4] sm:$0xf]
      %v2020 = vld [vmem:[%s14 + $0xd8] sm:$0xf]
      %v2021 = vld [vmem:[%s14 + $0xdc] sm:$0xf]
      %v2022 = vld [vmem:[%s14 + $0xe0] sm:$0xf]
      %v2023 = vld [vmem:[%s14 + $0xe4] sm:$0xf]
      %v2024 = vld [vmem:[%s14 + $0xe8] sm:$0xf]
      %v2025 = vld [vmem:[%s14 + $0xec] sm:$0xf]
      %v2026 = vld [vmem:[%s14 + $0xf0] sm:$0xf]
      %v2027 = vld [vmem:[%s14 + $0xf4] sm:$0xf]
      %v2028 = vld [vmem:[%s14 + $0xf8] sm:$0xf]
      %v2029 = vld [vmem:[%s14 + $0xfc] sm:$0xf]
      %v2030 = vld [vmem:[#allocation15] sm:$0x1]
      %v2032 = vlaneseq
      %v2033 = vshrl.u32 %v2032, 7
      %v2034 = vsub.s32 0, %v2033
      %v2035 = vrot.slane %v2030, %v2034
      %v2101 = vunpack.c.l.b16 %v1966
      %v2102 = vunpack.c.l.b16 %v1967
      %v2103 = vunpack.c.l.b16 %v1968
      %v2104 = vunpack.c.l.b16 %v1969
      %v2105 = vunpack.c.l.b16 %v1970
      %v2106 = vunpack.c.l.b16 %v1971
      %v2107 = vunpack.c.l.b16 %v1972
      %v2108 = vunpack.c.l.b16 %v1973
      %v2109 = vunpack.c.l.b16 %v1974
      %v2110 = vunpack.c.l.b16 %v1975
      %v2111 = vunpack.c.l.b16 %v1976
      %v2112 = vunpack.c.l.b16 %v1977
      %v2113 = vunpack.c.l.b16 %v1978
      %v2114 = vunpack.c.l.b16 %v1979
      %v2115 = vunpack.c.l.b16 %v1980
      %v2116 = vunpack.c.l.b16 %v1981
      %v2117 = vunpack.c.l.b16 %v1982
      %v2118 = vunpack.c.l.b16 %v1983
      %v2119 = vunpack.c.l.b16 %v1984
      %v2120 = vunpack.c.l.b16 %v1985
      %v2121 = vunpack.c.l.b16 %v1986
      %v2122 = vunpack.c.l.b16 %v1987
      %v2123 = vunpack.c.l.b16 %v1988
      %v2124 = vunpack.c.l.b16 %v1989
      %v2125 = vunpack.c.l.b16 %v1990
      %v2126 = vunpack.c.l.b16 %v1991
      %v2127 = vunpack.c.l.b16 %v1992
      %v2128 = vunpack.c.l.b16 %v1993
      %v2129 = vunpack.c.l.b16 %v1994
      %v2130 = vunpack.c.l.b16 %v1995
      %v2131 = vunpack.c.l.b16 %v1996
      %v2132 = vunpack.c.l.b16 %v1997
      %v2133 = vunpack.c.l.b16 %v1998
      %v2134 = vunpack.c.l.b16 %v1999
      %v2135 = vunpack.c.l.b16 %v2000
      %v2136 = vunpack.c.l.b16 %v2001
      %v2137 = vunpack.c.l.b16 %v2002
      %v2138 = vunpack.c.l.b16 %v2003
      %v2139 = vunpack.c.l.b16 %v2004
      %v2140 = vunpack.c.l.b16 %v2005
      %v2141 = vunpack.c.l.b16 %v2006
      %v2142 = vunpack.c.l.b16 %v2007
      %v2143 = vunpack.c.l.b16 %v2008
      %v2144 = vunpack.c.l.b16 %v2009
      %v2145 = vunpack.c.l.b16 %v2010
      %v2146 = vunpack.c.l.b16 %v2011
      %v2147 = vunpack.c.l.b16 %v2012
      %v2148 = vunpack.c.l.b16 %v2013
      %v2149 = vunpack.c.l.b16 %v2014
      %v2150 = vunpack.c.l.b16 %v2015
      %v2151 = vunpack.c.l.b16 %v2016
      %v2152 = vunpack.c.l.b16 %v2017
      %v2153 = vunpack.c.l.b16 %v2018
      %v2154 = vunpack.c.l.b16 %v2019
      %v2155 = vunpack.c.l.b16 %v2020
      %v2156 = vunpack.c.l.b16 %v2021
      %v2157 = vunpack.c.l.b16 %v2022
      %v2158 = vunpack.c.l.b16 %v2023
      %v2159 = vunpack.c.l.b16 %v2024
      %v2160 = vunpack.c.l.b16 %v2025
      %v2161 = vunpack.c.l.b16 %v2026
      %v2162 = vunpack.c.l.b16 %v2027
      %v2163 = vunpack.c.l.b16 %v2028
      %v2164 = vunpack.c.l.b16 %v2029
      %v2165 = vpack.c.b16 %v2102, %v2101
      %v2166 = vpack.c.b16 %v2104, %v2103
      %v2167 = vpack.c.b16 %v2106, %v2105
      %v2168 = vpack.c.b16 %v2108, %v2107
      %v2169 = vpack.c.b16 %v2110, %v2109
      %v2170 = vpack.c.b16 %v2112, %v2111
      %v2171 = vpack.c.b16 %v2114, %v2113
      %v2172 = vpack.c.b16 %v2116, %v2115
      %v2173 = vpack.c.b16 %v2118, %v2117
      %v2174 = vpack.c.b16 %v2120, %v2119
      %v2175 = vpack.c.b16 %v2122, %v2121
      %v2176 = vpack.c.b16 %v2124, %v2123
      %v2177 = vpack.c.b16 %v2126, %v2125
      %v2178 = vpack.c.b16 %v2128, %v2127
      %v2179 = vpack.c.b16 %v2130, %v2129
      %v2180 = vpack.c.b16 %v2132, %v2131
      %v2181 = vpack.c.b16 %v2134, %v2133
      %v2182 = vpack.c.b16 %v2136, %v2135
      %v2183 = vpack.c.b16 %v2138, %v2137
      %v2184 = vpack.c.b16 %v2140, %v2139
      %v2185 = vpack.c.b16 %v2142, %v2141
      %v2186 = vpack.c.b16 %v2144, %v2143
      %v2187 = vpack.c.b16 %v2146, %v2145
      %v2188 = vpack.c.b16 %v2148, %v2147
      %v2189 = vpack.c.b16 %v2150, %v2149
      %v2190 = vpack.c.b16 %v2152, %v2151
      %v2191 = vpack.c.b16 %v2154, %v2153
      %v2192 = vpack.c.b16 %v2156, %v2155
      %v2193 = vpack.c.b16 %v2158, %v2157
      %v2194 = vpack.c.b16 %v2160, %v2159
      %v2195 = vpack.c.b16 %v2162, %v2161
      %v2196 = vpack.c.b16 %v2164, %v2163
      %2229 = vmatprep.subr.bf16.mxu0 0
      %2230 = vmatpush1.bf16.msra.mxu0 %v2172
      %2231 = vmatprep.subr.bf16.mxu0 0
      %2232 = vmatpush1.bf16.msra.mxu0 %v2171
      %2233 = vmatprep.subr.bf16.mxu0 0
      %2234 = vmatpush1.bf16.msra.mxu0 %v2170
      %2235 = vmatprep.subr.bf16.mxu0 0
      %2236 = vmatpush1.bf16.msra.mxu0 %v2169
      %2237 = vmatprep.subr.bf16.mxu0 0
      %2238 = vmatpush1.bf16.msra.mxu0 %v2168
      %2239 = vmatprep.subr.bf16.mxu0 0
      %2240 = vmatpush1.bf16.msra.mxu0 %v2167
      %2241 = vmatprep.subr.bf16.mxu0 0
      %2242 = vmatpush1.bf16.msra.mxu0 %v2166
      %2243 = vmatprep.subr.bf16.mxu0 0
      %2244 = vmatpush1.bf16.msra.mxu0 %v2165
      %2245 = vmatprep.subr.bf16.mxu0 0
      %2246 = vmatpush2.bf16.msra.mxu0 %v2180
      %2247 = vmatprep.subr.bf16.mxu0 0
      %2248 = vmatpush2.bf16.msra.mxu0 %v2179
      %2249 = vmatprep.subr.bf16.mxu0 0
      %2250 = vmatpush2.bf16.msra.mxu0 %v2178
      %2251 = vmatprep.subr.bf16.mxu0 0
      %2252 = vmatpush2.bf16.msra.mxu0 %v2177
      %2253 = vmatprep.subr.bf16.mxu0 0
      %2254 = vmatpush2.bf16.msra.mxu0 %v2176
      %2255 = vmatprep.subr.bf16.mxu0 0
      %2256 = vmatpush2.bf16.msra.mxu0 %v2175
      %2257 = vmatprep.subr.bf16.mxu0 0
      %2258 = vmatpush2.bf16.msra.mxu0 %v2174
      %2259 = vmatprep.subr.bf16.mxu0 0
      %2260 = vmatpush2.bf16.msra.mxu0 %v2173
      %2261 = vmatprep.mubr.bf16.mxu0 %v1963
      %2262 = vmatmul.mubr.bf16.gmra.mxu0 %v1962
      %v2263 = vpop.f32.mrf.mxu0
      %v2264 = vadd.f32 %v2035, %v2263
      %v2265 = vpop.f32.mrf.mxu0
      %v2266 = vpop.f32.mrf.mxu0
      %v2267 = vadd.f32 %v2035, %v2266
      %v2268 = vpop.f32.mrf.mxu0
      %2269 = vdwg.mxu0
      %2270 = vmatprep.subr.bf16.mxu0 0
      %2271 = vmatpush1.bf16.msra.mxu0 %v2188
      %2272 = vmatprep.subr.bf16.mxu0 0
      %2273 = vmatpush1.bf16.msra.mxu0 %v2187
      %2274 = vmatprep.subr.bf16.mxu0 0
      %2275 = vmatpush1.bf16.msra.mxu0 %v2186
      %2276 = vmatprep.subr.bf16.mxu0 0
      %2277 = vmatpush1.bf16.msra.mxu0 %v2185
      %2278 = vmatprep.subr.bf16.mxu0 0
      %2279 = vmatpush1.bf16.msra.mxu0 %v2184
      %2280 = vmatprep.subr.bf16.mxu0 0
      %2281 = vmatpush1.bf16.msra.mxu0 %v2183
      %2282 = vmatprep.subr.bf16.mxu0 0
      %2283 = vmatpush1.bf16.msra.mxu0 %v2182
      %2284 = vmatprep.subr.bf16.mxu0 0
      %2285 = vmatpush1.bf16.msra.mxu0 %v2181
      %2286 = vmatprep.subr.bf16.mxu0 0
      %2287 = vmatpush2.bf16.msra.mxu0 %v2196
      %2288 = vmatprep.subr.bf16.mxu0 0
      %2289 = vmatpush2.bf16.msra.mxu0 %v2195
      %2290 = vmatprep.subr.bf16.mxu0 0
      %2291 = vmatpush2.bf16.msra.mxu0 %v2194
      %2292 = vmatprep.subr.bf16.mxu0 0
      %2293 = vmatpush2.bf16.msra.mxu0 %v2193
      %2294 = vmatprep.subr.bf16.mxu0 0
      %2295 = vmatpush2.bf16.msra.mxu0 %v2192
      %2296 = vmatprep.subr.bf16.mxu0 0
      %2297 = vmatpush2.bf16.msra.mxu0 %v2191
      %2298 = vmatprep.subr.bf16.mxu0 0
      %2299 = vmatpush2.bf16.msra.mxu0 %v2190
      %2300 = vmatprep.subr.bf16.mxu0 0
      %2301 = vmatpush2.bf16.msra.mxu0 %v2189
      %2302 = vmatprep.mubr.bf16.mxu0 %v1965
      %2303 = vmatmul.mubr.bf16.gmra.mxu0 %v1964
      %v2304 = vpop.f32.mrf.mxu0
      %v2305 = vadd.f32 %v2264, %v2304
      %v2306 = vpop.f32.mrf.mxu0
      %v2307 = vpop.f32.mrf.mxu0
      %v2308 = vadd.f32 %v2267, %v2307
      %v2309 = vpop.f32.mrf.mxu0
      %2310 = vdwg.mxu0
      %v2311 = vadd.f32 %v1571, %v2305
      %v2312 = vadd.f32 %v1572, %v2308
      %v2313 = vrot.slane %v2311, 4
      %v2314 = vadd.f32 %v2311, %v2313
      %v2315 = vrot.slane %v2314, 2
      %v2316 = vadd.f32 %v2314, %v2315
      %v2317 = vrot.slane %v2316, 1
      %v2318 = vadd.f32 %v2316, %v2317
      %v2319 = vrot.slane %v2312, 4
      %v2320 = vadd.f32 %v2312, %v2319
      %v2321 = vrot.slane %v2320, 2
      %v2322 = vadd.f32 %v2320, %v2321
      %v2323 = vrot.slane %v2322, 1
      %v2324 = vadd.f32 %v2322, %v2323
      %v2325 = vmul.f32 %v2318, %v723
      %v2326 = vmul.f32 %v2324, %v723
      %v2327 = vmul.f32 %v2325, %v2325
      %v2328 = vmul.f32 %v2326, %v2326
      %vm2331 = vcmask 1041409
      %v2332 = vsel %vm2331, %v2328, %v2327
      %vm2334 = vcmask 1041408
      %v2335 = vsel %vm2334, %v2332, 0.0
      %2336 = vadd.xlane.f32.xlu0 %v2335
      %v2337 = vpop.xlane.xlu0 %2336
      %v2338 = vadd.f32 %v2337, 1e-12
      %v2339 = vrsqrt.pop %v2338
      %v2341 = vrot.slane %v2339, 1
      %v2344 = vmul.f32 %v2325, %v2339
      %v2345 = vmul.f32 %v2326, %v2341
      %v2346 = vmul.f32 %v724, %v724
      %v2347 = vmul.f32 %v725, %v725
      %v2350 = vsel %vm2331, %v2347, %v2346
      %v2352 = vsel %vm2334, %v2350, 0.0
      %2353 = vadd.xlane.f32.xlu0 %v2352
      %v2354 = vpop.xlane.xlu0 %2353
      %v2355 = vadd.f32 %v2354, 1e-12
      %v2356 = vrsqrt.pop %v2355
      %v2358 = vrot.slane %v2356, 1
      %v2361 = vmul.f32 %v724, %v2356
      %v2362 = vmul.f32 %v725, %v2358
      %v2363 = vmul.f32 %v2361, %v2361
      %v2364 = vmul.f32 %v2362, %v2362
      %v2367 = vrot.slane %v2364, 7
      %v2368 = vsel %vm2331, %v2367, %v2363
      %v2370 = vsel %vm2334, %v2368, 0.0
      %2371 = vadd.xlane.f32.xlu0 %v2370
      %v2372 = vpop.xlane.xlu0 %2371
      %v2373 = vmul.f32 %v2344, %v2361
      %v2374 = vmul.f32 %v2345, %v2362
      %v2376 = vrot.slane %v2372, 1
      %v2379 = vrcp.pop %v2372
      %v2380 = vmul.f32 %v2373, %v2379
      %v2381 = vrcp.pop %v2376
      %v2382 = vmul.f32 %v2374, %v2381
      %v2383 = vmul.f32 %v2380, %v2361
      %v2384 = vmul.f32 %v2382, %v2362
      %v2385 = vsub.f32 %v2344, %v2383
      %v2386 = vsub.f32 %v2345, %v2384
      %v2387 = vadd.f32 %v2361, %v2385
      %v2388 = vadd.f32 %v2362, %v2386
      %s2389 = sld [smem:[#allocation3]]
      %v2392 = vrot.slane %v2388, 7
      %v2393 = vsel %vm2331, %v2392, %v2387
      %v2397 = vrot.slane %v2344, 6
      %v2398 = vrot.slane %v2345, 5
      %vm2399 = vcmask 1043459
      %v2400 = vsel %vm2399, %v2398, %v2397
      %v2402 = vsel %vm2334, %v2393, %v2400
      %v2403 = vpack.c.bf16 %v2402, %v2402
      %v2404 = vld [vmem:[%s16] sm:$0xf]
      %2405 = vmatprep.subr.bf16.mxu0 0
      %2406 = vmatpush1.bf16.xpose.msra.mxu0 0
      %2407 = vmatprep.subr.bf16.mxu0 0
      %2408 = vmatpush1.bf16.xpose.msra.mxu0 0
      %2409 = vmatprep.subr.bf16.mxu0 0
      %2410 = vmatpush1.bf16.xpose.msra.mxu0 0
      %2411 = vmatprep.subr.bf16.mxu0 0
      %2412 = vmatpush1.bf16.xpose.msra.mxu0 0
      %2413 = vmatprep.subr.bf16.mxu0 0
      %2414 = vmatpush1.bf16.xpose.msra.mxu0 0
      %2415 = vmatprep.subr.bf16.mxu0 0
      %2416 = vmatpush1.bf16.xpose.msra.mxu0 0
      %2417 = vmatprep.subr.bf16.mxu0 0
      %2418 = vmatpush1.bf16.xpose.msra.mxu0 0
      %2419 = vmatprep.subr.bf16.mxu0 0
      %2420 = vmatpush1.bf16.xpose.msra.mxu0 %v2404
      %2421 = vmatprep.subr.bf16.mxu0 0
      %2422 = vmatpush2.bf16.xpose.msra.mxu0 0
      %2423 = vmatprep.subr.bf16.mxu0 0
      %2424 = vmatpush2.bf16.xpose.msra.mxu0 0
      %2425 = vmatprep.subr.bf16.mxu0 0
      %2426 = vmatpush2.bf16.xpose.msra.mxu0 0
      %2427 = vmatprep.subr.bf16.mxu0 0
      %2428 = vmatpush2.bf16.xpose.msra.mxu0 0
      %2429 = vmatprep.subr.bf16.mxu0 0
      %2430 = vmatpush2.bf16.xpose.msra.mxu0 0
      %2431 = vmatprep.subr.bf16.mxu0 0
      %2432 = vmatpush2.bf16.xpose.msra.mxu0 0
      %2433 = vmatprep.subr.bf16.mxu0 0
      %2434 = vmatpush2.bf16.xpose.msra.mxu0 0
      %2435 = vmatprep.subr.bf16.mxu0 0
      %2436 = vmatpush2.bf16.xpose.msra.mxu0 0
      %2437 = vmatprep.mubr.bf16.mxu0 0
      %2438 = vmatmul.mubr.bf16.gmra.mxu0 %v2403
      %v2439 = vpop.f32.mrf.mxu0
      %v2440 = vadd.f32 0.0, %v2439
      %v2441 = vpop.f32.mrf.mxu0
      %v2442 = vpop.f32.mrf.mxu0
      %v2443 = vpop.f32.mrf.mxu0
      %2444 = vdwg.mxu0
      %v2445 = vstv %s2389
      %v2446 = vmul.f32 %v2445, %v2440
      %2447 = vst [vmem:[%s18] sm:$0x1] %v2344
      %2448 = vst [vmem:[%s18 + $0x2] sm:$0x1] %v2345
      %2449 = vst [vmem:[%s18 + $0x1] sm:$0x1] %v2361
      %2450 = vst [vmem:[%s18 + $0x3] sm:$0x1] %v2362
      %v2453 = vunpack.c.l.s4 1966171168
      %v2454 = vunpack.c.0.s8 %v2453
      %v2455 = vlaneseq
      %v2456 = vshrl.u32 %v2455, 7
      %v2457 = vsub.s32 %v2454, %v2456
      %v2458 = vrot.slane %v2446, %v2457
      %v2459 = vcombine.high %v2458, %v2458
      %v2461 = vunpack.c.l.s4 1966171168
      %v2462 = vunpack.c.0.s8 %v2461
      %v2463 = vlaneseq
      %v2464 = vshrl.u32 %v2463, 7
      %v2465 = vsub.s32 %v2462, %v2464
      %v2466 = vrot.slane %v2458, %v2465
      %v2468 = vunpack.c.l.s4 1966171168
      %v2469 = vunpack.c.0.s8 %v2468
      %v2470 = vlaneseq
      %v2471 = vshrl.u32 %v2470, 7
      %v2472 = vsub.s32 %v2469, %v2471
      %v2473 = vrot.slane %v2459, %v2472
      %vm2476 = vcmask 57344
      %2477 = vst.msk [vmem:[%s19] sm:$0x1] %vm2476, %v2466
      %2478 = vst.msk [vmem:[%s19 + $0x2] sm:$0x1] %vm2476, %v2473
      %v2479 = vcombine.high %v2466, %v2466
      %v2480 = vcombine.high %v2473, %v2473
      %2483 = vst.msk [vmem:[%s19 + $0x1] sm:$0x1] %vm2476, %v2479
      %2484 = vst.msk [vmem:[%s19 + $0x3] sm:$0x1] %vm2476, %v2480
    $region113: #{oti_forward.1} parent=1 // pred_fallthru
      _
    // Predicated region
    $region114: #{oti_forward.1} parent=1 // pred_check
      _
    $region115: #{oti_forward.1} parent=1 // pred_check_branch
      %2486 = sbr.rel (0) target = $region117
    $region116: #{oti_forward.1} parent=1 // pred_region
      _
    $region117: #{oti_forward.1} parent=1 // pred_fallthru
      _
    // Predicated region
    $region118: #{oti_forward.1} parent=1 // pred_check
      _
    $region119: #{oti_forward.1} parent=1 // pred_check_branch
      %2488 = sbr.rel (0) target = $region121
    $region120: #{oti_forward.1} parent=1 // pred_region
      _
    $region121: #{oti_forward.1} parent=1 // pred_fallthru
      _
    // Predicated region
    $region122: #{oti_forward.1} parent=1 // pred_check
      _
    $region123: #{oti_forward.1} parent=1 // pred_check_branch
      %2490 = sbr.rel (0) target = $region125
    $region124: #{oti_forward.1} parent=1 // pred_region
      _
    $region125: #{oti_forward.1} parent=1 // pred_fallthru
      _
    // Predicated region
    $region126: #{oti_forward.1} parent=1 // pred_check
      _
    $region127: #{oti_forward.1} parent=1 // pred_check_branch
      %2492 = sbr.rel (0) target = $region129
    $region128: #{oti_forward.1} parent=1 // pred_region
      _
    $region129: #{oti_forward.1} parent=1 // pred_fallthru
      _
    %2493 = vsyncpa [#allocation5], 1
    %2494 = vsyncpa [#allocation7], 1
    %2495 = vsyncpa [#allocation10], 1
    %2496 = vsyncpa [#allocation13], 1
    %2497 = vsyncpa [#allocation16], 1

</llo_original>
